<compile_context>
chip_gen: v5e
topology: v5e:2x2
jax: 0.10.0
libtpu: 0.0.40
codegen_flags: <defaults>
</compile_context>

<pallas_src>
import jax
import jax.numpy as jnp
from jax.experimental import pallas as pl
from jax.experimental.pallas import tpu as pltpu

# ---------------- configuration (small, consistent with the module) ---------
NUM_WORDS = 100      # vocabulary size
WORD_DIM = 32        # word embedding dim
TREE_INPUT_DIM = 32  # leaf-RNN output dim (bi-LSTM: 2 * 16)
HIDDEN = TREE_INPUT_DIM // 2   # per-direction LSTM hidden (bi_leaf_rnn=True)
SEQ = 8              # number of leaves / sequence length per tree
BATCH = 4            # number of trees processed by one pallas_call


# ---------------- Pallas kernel: fused, batched bidirectional LSTM ----------
def _bilstm_fused_kernel(tok_ref, emb_ref, w2_ref, whh2_ref, b2_ref, out_ref):
    # tok_ref : (B, T)   int32 leaf word ids (SMEM, scalar-prefetched)
    # emb_ref : (V, D)   embedding table (whole array in VMEM)
    # w2_ref  : (2D, 8H) fused input weight, gate/direction interleaved lanes
    # whh2_ref: (2H, 8H) block-diagonal fused recurrent weight
    # b2_ref  : (1, 8H)  fused (b_ih + b_hh) bias for both directions
    # out_ref : (B, T*2H) lane-dense slab; row b = time-ordered [h_f|h_b] per t
    B, T = tok_ref.shape
    H8 = w2_ref.shape[1]          # 8*H = 128 lanes (4 gates x 2 directions)
    H2 = H8 // 4                  # 2*H = 32  (fused fwd|bwd state width)
    H = H2 // 2

    # --- in-kernel embedding gather (eval-mode dropout_in == identity) ------
    # One dynamic (1, D) row load per (tree, leaf); everything below up to the
    # recurrence is off the serial critical chain.
    word = [[emb_ref[pl.ds(tok_ref[b, t], 1), :] for t in range(T)]
            for b in range(B)]
    # Step-major rows (index = s*B + b): forward lanes read word[b][s],
    # backward lanes read word[b][T-1-s].
    fwd = jnp.concatenate(
        [word[b][s] for s in range(T) for b in range(B)], axis=0)
    bwd = jnp.concatenate(
        [word[b][T - 1 - s] for s in range(T) for b in range(B)], axis=0)
    x2 = jnp.concatenate([fwd, bwd], axis=1)          # (T*B, 2D)

    # One lane-dense input projection for all trees, timesteps and both
    # directions (single MXU pass), bias added once outside the recurrence.
    xw = jnp.dot(x2, w2_ref[...],
                 preferred_element_type=jnp.float32) + b2_ref[...]

    # Recurrent weight hoisted out of the serial loop (32x128 f32 = 4 vregs).
    whh = whh2_ref[...]

    h = jnp.zeros((B, H2), jnp.float32)   # per-tree [h_fwd | h_bwd]
    c = jnp.zeros((B, H2), jnp.float32)   # per-tree [c_fwd | c_bwd]
    hs = []

    # Statically unrolled fused recurrence: step s advances forward time s and
    # backward time T-1-s for ALL trees through one (B,32)@(32,128) matmul.
    # Batch rides only the matmul M dimension -> no cross-tree mixing.
    for s in range(T):
        z = xw[s * B:(s + 1) * B, :] + jnp.dot(
            h, whh, preferred_element_type=jnp.float32)     # (B, 8H)
        # Single 128-lane sigmoid; the g-gate lanes get sigmoid'd too and are
        # simply discarded (intentional: one EUP pass beats three partials).
        sg = jax.nn.sigmoid(z)
        i = sg[:, 0 * H2:1 * H2]                    # [i_f | i_b]
        f = sg[:, 1 * H2:2 * H2]                    # [f_f | f_b]
        g = jnp.tanh(z[:, 2 * H2:3 * H2])           # [g_f | g_b]
        o = sg[:, 3 * H2:4 * H2]                    # [o_f | o_b]
        c = f * c + i * g
        h = o * jnp.tanh(c)
        hs.append(h)

    # Assemble the lane-dense output slab with the backward half already in
    # time order: row b, lanes [t*2H, t*2H+H) = h_fwd(b, t),
    #                      lanes [t*2H+H, (t+1)*2H) = h_bwd(b, t) = hs[T-1-t].
    cols = []
    for t in range(T):
        cols.append(hs[t][:, :H])                   # forward, time t
        cols.append(hs[T - 1 - t][:, H:])           # backward, time t
    out_ref[...] = jnp.concatenate(cols, axis=1).astype(out_ref.dtype)


def bilstm_fused(token_ids, emb, w2, whh2, b2):
    B, T = token_ids.shape
    V, D = emb.shape
    H8 = w2.shape[1]
    H2 = H8 // 4
    flops = 2 * (T * B) * (2 * D) * H8 + T * (2 * B * H2 * H8 + 8 * B * H2)
    trans = T * B * (H8 + 2 * H2)
    bytes_accessed = (V * D + 2 * D * H8 + H2 * H8 + H8 + B * T * H2) * 4 \
        + B * T * 4
    return pl.pallas_call(
        _bilstm_fused_kernel,
        out_shape=jax.ShapeDtypeStruct((B, T * H2), jnp.float32),
        grid_spec=pltpu.PrefetchScalarGridSpec(
            num_scalar_prefetch=1,                       # token_ids -> SMEM
            grid=(1,),
            in_specs=[
                pl.BlockSpec((V, D), lambda i, tok: (0, 0)),        # emb
                pl.BlockSpec((2 * D, H8), lambda i, tok: (0, 0)),   # fused Wih
                pl.BlockSpec((H2, H8), lambda i, tok: (0, 0)),      # fused Whh
                pl.BlockSpec((1, H8), lambda i, tok: (0, 0)),       # fused bias
            ],
            out_specs=pl.BlockSpec((B, T * H2), lambda i, tok: (0, 0)),
        ),
        compiler_params=pltpu.CompilerParams(
            dimension_semantics=("arbitrary",)),
        cost_estimate=pl.CostEstimate(
            flops=flops, transcendentals=trans,
            bytes_accessed=bytes_accessed),
    )(token_ids, emb, w2, whh2, b2)


# ---------------- parameter initialization (deterministic, in-script) -------
def init_params(key):
    ks = jax.random.split(key, 10)
    emb_scale = jnp.sqrt(3.0 / WORD_DIM)           # reset_embedding()
    lstm_scale = 1.0 / jnp.sqrt(HIDDEN)            # nn.LSTM default init
    params = {
        "embedding": jax.random.uniform(
            ks[0], (NUM_WORDS, WORD_DIM), jnp.float32, -emb_scale, emb_scale),
        # forward direction (stored transposed: [in, 4H], gate order i,f,g,o)
        "wih_f": jax.random.uniform(
            ks[1], (WORD_DIM, 4 * HIDDEN), jnp.float32, -lstm_scale, lstm_scale),
        "whh_f": jax.random.uniform(
            ks[2], (HIDDEN, 4 * HIDDEN), jnp.float32, -lstm_scale, lstm_scale),
        "b_f": (jax.random.uniform(ks[3], (1, 4 * HIDDEN), jnp.float32,
                                   -lstm_scale, lstm_scale)
                + jax.random.uniform(ks[4], (1, 4 * HIDDEN), jnp.float32,
                                     -lstm_scale, lstm_scale)),  # b_ih + b_hh
        # backward direction
        "wih_b": jax.random.uniform(
            ks[5], (WORD_DIM, 4 * HIDDEN), jnp.float32, -lstm_scale, lstm_scale),
        "whh_b": jax.random.uniform(
            ks[6], (HIDDEN, 4 * HIDDEN), jnp.float32, -lstm_scale, lstm_scale),
        "b_b": (jax.random.uniform(ks[7], (1, 4 * HIDDEN), jnp.float32,
                                   -lstm_scale, lstm_scale)
                + jax.random.uniform(ks[8], (1, 4 * HIDDEN), jnp.float32,
                                     -lstm_scale, lstm_scale)),
    }
    return params


def pack_bilstm_params(p):
    """Pack the two directions into fused, lane-dense kernel weights.

    Lane layout (8H = 128): [i_f i_b | f_f f_b | g_f g_b | o_f o_b], H each.
    w2  : (2D, 8H)  rows 0:D multiply word[t], rows D:2D multiply word[T-1-t]
    whh2: (2H, 8H)  block diagonal: rows 0:H <- h_fwd, rows H:2H <- h_bwd
    b2  : (1, 8H)
    """
    D, H4 = p["wih_f"].shape
    H = H4 // 4
    w2 = jnp.zeros((2 * D, 8 * H), jnp.float32)
    whh2 = jnp.zeros((2 * H, 8 * H), jnp.float32)
    b2 = jnp.zeros((1, 8 * H), jnp.float32)
    for k in range(4):                                  # gate order i, f, g, o
        fcol = slice(2 * k * H, (2 * k + 1) * H)        # forward lane group
        bcol = slice((2 * k + 1) * H, (2 * k + 2) * H)  # backward lane group
        gsl = slice(k * H, (k + 1) * H)
        w2 = w2.at[0:D, fcol].set(p["wih_f"][:, gsl])
        w2 = w2.at[D:2 * D, bcol].set(p["wih_b"][:, gsl])
        whh2 = whh2.at[0:H, fcol].set(p["whh_f"][:, gsl])
        whh2 = whh2.at[H:2 * H, bcol].set(p["whh_b"][:, gsl])
        b2 = b2.at[:, fcol].set(p["b_f"][:, gsl])
        b2 = b2.at[:, bcol].set(p["b_b"][:, gsl])
    return {"w2": w2, "whh2": whh2, "b2": b2}


# ---------------- BiTreeLstm.forward (returned value), batched over trees ---
def bi_tree_lstm_forward(params, packed, token_ids):
    # word = dropout_in(self.word_embedding(tree.get_yield()))  (eval: no drop)
    # seq_output, _ = self.rnn(word)   -- bidirectional single-layer LSTM
    # Embedding gather, direction pairing and time re-ordering all happen
    # INSIDE the single Pallas call; only a free reshape remains here.
    slab = bilstm_fused(token_ids.astype(jnp.int32), params["embedding"],
                        packed["w2"], packed["whh2"], packed["b2"])
    B, T = token_ids.shape
    return slab.reshape(B, T, 2 * HIDDEN)   # row b == BiTreeLstm.forward(tree_b)


# ---------------- pure-JAX reference (for sanity check) ---------------------
def _ref_bilstm(x, wih_f, whh_f, b_f, wih_b, whh_b, b_b):
    T = x.shape[0]
    H = whh_f.shape[0]

    def run(xw, whh, order):
        h = jnp.zeros((H,), jnp.float32)
        c = jnp.zeros((H,), jnp.float32)
        outs = [None] * T
        for t in order:
            z = xw[t] + h @ whh
            i = jax.nn.sigmoid(z[0:H])
            f = jax.nn.sigmoid(z[H:2 * H])
            g = jnp.tanh(z[2 * H:3 * H])
            o = jax.nn.sigmoid(z[3 * H:4 * H])
            c = f * c + i * g
            h = o * jnp.tanh(c)
            outs[t] = h
        return jnp.stack(outs, axis=0)

    xwf = x @ wih_f + b_f[0]
    xwb = x @ wih_b + b_b[0]
    hf = run(xwf, whh_f, range(T))
    hb = run(xwb, whh_b, range(T - 1, -1, -1))
    return jnp.concatenate([hf, hb], axis=-1)


if __name__ == "__main__":
    key = jax.random.PRNGKey(0)
    pkey, dkey = jax.random.split(key)
    params = init_params(pkey)
    packed = pack_bilstm_params(params)

    # Leaf word ids (tree.get_yield()) for BATCH trees with SEQ leaves each.
    token_ids = jax.random.randint(dkey, (BATCH, SEQ), 0, NUM_WORDS)

    seq_output = bi_tree_lstm_forward(params, packed, token_ids)
    seq_output = jax.block_until_ready(seq_output)
    assert seq_output.shape == (BATCH, SEQ, TREE_INPUT_DIM)

    # Sanity check every tree against a pure-JAX reference of the same math.
    for b in range(BATCH):
        word = params["embedding"][token_ids[b]]
        ref = _ref_bilstm(word,
                          params["wih_f"], params["whh_f"], params["b_f"],
                          params["wih_b"], params["whh_b"], params["b_b"])
        assert jnp.allclose(seq_output[b], ref, atol=1e-5, rtol=1e-4), (
            f"mismatch for tree {b}")

    print("KERNEL_OK")
</pallas_src>

<mosaic_0001>
module attributes {stable_mosaic.version = 11 : i64} {
  func.func @_bilstm_fused_kernel(%arg0: i32, %arg1: memref<4x8xi32, #tpu.memory_space<smem>>, %arg2: memref<100x32xf32, #tpu.memory_space<vmem>>, %arg3: memref<64x128xf32, #tpu.memory_space<vmem>>, %arg4: memref<32x128xf32, #tpu.memory_space<vmem>>, %arg5: memref<1x128xf32, #tpu.memory_space<vmem>>, %arg6: memref<4x256xf32, #tpu.memory_space<vmem>>) attributes {dimension_semantics = [#tpu.dimension_semantics<arbitrary>], iteration_bounds = array<i64: 1>, scalar_prefetch = 1 : i64, scratch_operands = 0 : i64, tpu.core_type = #tpu.core_type<tc>, window_params = [{pipeline_mode = #tpu.pipeline_mode<synchronous>, transform_indices = @transform_0, window_bounds = array<i64: 100, 32>}, {pipeline_mode = #tpu.pipeline_mode<synchronous>, transform_indices = @transform_1, window_bounds = array<i64: 64, 128>}, {pipeline_mode = #tpu.pipeline_mode<synchronous>, transform_indices = @transform_2, window_bounds = array<i64: 32, 128>}, {pipeline_mode = #tpu.pipeline_mode<synchronous>, transform_indices = @transform_3, window_bounds = array<i64: 1, 128>}, {pipeline_mode = #tpu.pipeline_mode<synchronous>, transform_indices = @transform_4, window_bounds = array<i64: 4, 256>}]} {
    %c0 = arith.constant 0 : index
    %c0_0 = arith.constant 0 : index
    %0 = memref.load %arg1[%c0, %c0_0] : memref<4x8xi32, #tpu.memory_space<smem>>
    %1 = arith.index_cast %0 : i32 to index
    %c0_1 = arith.constant 0 : index
    %2 = vector.load %arg2[%1, %c0_1] : memref<100x32xf32, #tpu.memory_space<vmem>>, vector<1x32xf32>
    %c0_2 = arith.constant 0 : index
    %c1 = arith.constant 1 : index
    %3 = memref.load %arg1[%c0_2, %c1] : memref<4x8xi32, #tpu.memory_space<smem>>
    %4 = arith.index_cast %3 : i32 to index
    %c0_3 = arith.constant 0 : index
    %5 = vector.load %arg2[%4, %c0_3] : memref<100x32xf32, #tpu.memory_space<vmem>>, vector<1x32xf32>
    %c0_4 = arith.constant 0 : index
    %c2 = arith.constant 2 : index
    %6 = memref.load %arg1[%c0_4, %c2] : memref<4x8xi32, #tpu.memory_space<smem>>
    %7 = arith.index_cast %6 : i32 to index
    %c0_5 = arith.constant 0 : index
    %8 = vector.load %arg2[%7, %c0_5] : memref<100x32xf32, #tpu.memory_space<vmem>>, vector<1x32xf32>
    %c0_6 = arith.constant 0 : index
    %c3 = arith.constant 3 : index
    %9 = memref.load %arg1[%c0_6, %c3] : memref<4x8xi32, #tpu.memory_space<smem>>
    %10 = arith.index_cast %9 : i32 to index
    %c0_7 = arith.constant 0 : index
    %11 = vector.load %arg2[%10, %c0_7] : memref<100x32xf32, #tpu.memory_space<vmem>>, vector<1x32xf32>
    %c0_8 = arith.constant 0 : index
    %c4 = arith.constant 4 : index
    %12 = memref.load %arg1[%c0_8, %c4] : memref<4x8xi32, #tpu.memory_space<smem>>
    %13 = arith.index_cast %12 : i32 to index
    %c0_9 = arith.constant 0 : index
    %14 = vector.load %arg2[%13, %c0_9] : memref<100x32xf32, #tpu.memory_space<vmem>>, vector<1x32xf32>
    %c0_10 = arith.constant 0 : index
    %c5 = arith.constant 5 : index
    %15 = memref.load %arg1[%c0_10, %c5] : memref<4x8xi32, #tpu.memory_space<smem>>
    %16 = arith.index_cast %15 : i32 to index
    %c0_11 = arith.constant 0 : index
    %17 = vector.load %arg2[%16, %c0_11] : memref<100x32xf32, #tpu.memory_space<vmem>>, vector<1x32xf32>
    %c0_12 = arith.constant 0 : index
    %c6 = arith.constant 6 : index
    %18 = memref.load %arg1[%c0_12, %c6] : memref<4x8xi32, #tpu.memory_space<smem>>
    %19 = arith.index_cast %18 : i32 to index
    %c0_13 = arith.constant 0 : index
    %20 = vector.load %arg2[%19, %c0_13] : memref<100x32xf32, #tpu.memory_space<vmem>>, vector<1x32xf32>
    %c0_14 = arith.constant 0 : index
    %c7 = arith.constant 7 : index
    %21 = memref.load %arg1[%c0_14, %c7] : memref<4x8xi32, #tpu.memory_space<smem>>
    %22 = arith.index_cast %21 : i32 to index
    %c0_15 = arith.constant 0 : index
    %23 = vector.load %arg2[%22, %c0_15] : memref<100x32xf32, #tpu.memory_space<vmem>>, vector<1x32xf32>
    %c1_16 = arith.constant 1 : index
    %c0_17 = arith.constant 0 : index
    %24 = memref.load %arg1[%c1_16, %c0_17] : memref<4x8xi32, #tpu.memory_space<smem>>
    %25 = arith.index_cast %24 : i32 to index
    %c0_18 = arith.constant 0 : index
    %26 = vector.load %arg2[%25, %c0_18] : memref<100x32xf32, #tpu.memory_space<vmem>>, vector<1x32xf32>
    %c1_19 = arith.constant 1 : index
    %c1_20 = arith.constant 1 : index
    %27 = memref.load %arg1[%c1_19, %c1_20] : memref<4x8xi32, #tpu.memory_space<smem>>
    %28 = arith.index_cast %27 : i32 to index
    %c0_21 = arith.constant 0 : index
    %29 = vector.load %arg2[%28, %c0_21] : memref<100x32xf32, #tpu.memory_space<vmem>>, vector<1x32xf32>
    %c1_22 = arith.constant 1 : index
    %c2_23 = arith.constant 2 : index
    %30 = memref.load %arg1[%c1_22, %c2_23] : memref<4x8xi32, #tpu.memory_space<smem>>
    %31 = arith.index_cast %30 : i32 to index
    %c0_24 = arith.constant 0 : index
    %32 = vector.load %arg2[%31, %c0_24] : memref<100x32xf32, #tpu.memory_space<vmem>>, vector<1x32xf32>
    %c1_25 = arith.constant 1 : index
    %c3_26 = arith.constant 3 : index
    %33 = memref.load %arg1[%c1_25, %c3_26] : memref<4x8xi32, #tpu.memory_space<smem>>
    %34 = arith.index_cast %33 : i32 to index
    %c0_27 = arith.constant 0 : index
    %35 = vector.load %arg2[%34, %c0_27] : memref<100x32xf32, #tpu.memory_space<vmem>>, vector<1x32xf32>
    %c1_28 = arith.constant 1 : index
    %c4_29 = arith.constant 4 : index
    %36 = memref.load %arg1[%c1_28, %c4_29] : memref<4x8xi32, #tpu.memory_space<smem>>
    %37 = arith.index_cast %36 : i32 to index
    %c0_30 = arith.constant 0 : index
    %38 = vector.load %arg2[%37, %c0_30] : memref<100x32xf32, #tpu.memory_space<vmem>>, vector<1x32xf32>
    %c1_31 = arith.constant 1 : index
    %c5_32 = arith.constant 5 : index
    %39 = memref.load %arg1[%c1_31, %c5_32] : memref<4x8xi32, #tpu.memory_space<smem>>
    %40 = arith.index_cast %39 : i32 to index
    %c0_33 = arith.constant 0 : index
    %41 = vector.load %arg2[%40, %c0_33] : memref<100x32xf32, #tpu.memory_space<vmem>>, vector<1x32xf32>
    %c1_34 = arith.constant 1 : index
    %c6_35 = arith.constant 6 : index
    %42 = memref.load %arg1[%c1_34, %c6_35] : memref<4x8xi32, #tpu.memory_space<smem>>
    %43 = arith.index_cast %42 : i32 to index
    %c0_36 = arith.constant 0 : index
    %44 = vector.load %arg2[%43, %c0_36] : memref<100x32xf32, #tpu.memory_space<vmem>>, vector<1x32xf32>
    %c1_37 = arith.constant 1 : index
    %c7_38 = arith.constant 7 : index
    %45 = memref.load %arg1[%c1_37, %c7_38] : memref<4x8xi32, #tpu.memory_space<smem>>
    %46 = arith.index_cast %45 : i32 to index
    %c0_39 = arith.constant 0 : index
    %47 = vector.load %arg2[%46, %c0_39] : memref<100x32xf32, #tpu.memory_space<vmem>>, vector<1x32xf32>
    %c2_40 = arith.constant 2 : index
    %c0_41 = arith.constant 0 : index
    %48 = memref.load %arg1[%c2_40, %c0_41] : memref<4x8xi32, #tpu.memory_space<smem>>
    %49 = arith.index_cast %48 : i32 to index
    %c0_42 = arith.constant 0 : index
    %50 = vector.load %arg2[%49, %c0_42] : memref<100x32xf32, #tpu.memory_space<vmem>>, vector<1x32xf32>
    %c2_43 = arith.constant 2 : index
    %c1_44 = arith.constant 1 : index
    %51 = memref.load %arg1[%c2_43, %c1_44] : memref<4x8xi32, #tpu.memory_space<smem>>
    %52 = arith.index_cast %51 : i32 to index
    %c0_45 = arith.constant 0 : index
    %53 = vector.load %arg2[%52, %c0_45] : memref<100x32xf32, #tpu.memory_space<vmem>>, vector<1x32xf32>
    %c2_46 = arith.constant 2 : index
    %c2_47 = arith.constant 2 : index
    %54 = memref.load %arg1[%c2_46, %c2_47] : memref<4x8xi32, #tpu.memory_space<smem>>
    %55 = arith.index_cast %54 : i32 to index
    %c0_48 = arith.constant 0 : index
    %56 = vector.load %arg2[%55, %c0_48] : memref<100x32xf32, #tpu.memory_space<vmem>>, vector<1x32xf32>
    %c2_49 = arith.constant 2 : index
    %c3_50 = arith.constant 3 : index
    %57 = memref.load %arg1[%c2_49, %c3_50] : memref<4x8xi32, #tpu.memory_space<smem>>
    %58 = arith.index_cast %57 : i32 to index
    %c0_51 = arith.constant 0 : index
    %59 = vector.load %arg2[%58, %c0_51] : memref<100x32xf32, #tpu.memory_space<vmem>>, vector<1x32xf32>
    %c2_52 = arith.constant 2 : index
    %c4_53 = arith.constant 4 : index
    %60 = memref.load %arg1[%c2_52, %c4_53] : memref<4x8xi32, #tpu.memory_space<smem>>
    %61 = arith.index_cast %60 : i32 to index
    %c0_54 = arith.constant 0 : index
    %62 = vector.load %arg2[%61, %c0_54] : memref<100x32xf32, #tpu.memory_space<vmem>>, vector<1x32xf32>
    %c2_55 = arith.constant 2 : index
    %c5_56 = arith.constant 5 : index
    %63 = memref.load %arg1[%c2_55, %c5_56] : memref<4x8xi32, #tpu.memory_space<smem>>
    %64 = arith.index_cast %63 : i32 to index
    %c0_57 = arith.constant 0 : index
    %65 = vector.load %arg2[%64, %c0_57] : memref<100x32xf32, #tpu.memory_space<vmem>>, vector<1x32xf32>
    %c2_58 = arith.constant 2 : index
    %c6_59 = arith.constant 6 : index
    %66 = memref.load %arg1[%c2_58, %c6_59] : memref<4x8xi32, #tpu.memory_space<smem>>
    %67 = arith.index_cast %66 : i32 to index
    %c0_60 = arith.constant 0 : index
    %68 = vector.load %arg2[%67, %c0_60] : memref<100x32xf32, #tpu.memory_space<vmem>>, vector<1x32xf32>
    %c2_61 = arith.constant 2 : index
    %c7_62 = arith.constant 7 : index
    %69 = memref.load %arg1[%c2_61, %c7_62] : memref<4x8xi32, #tpu.memory_space<smem>>
    %70 = arith.index_cast %69 : i32 to index
    %c0_63 = arith.constant 0 : index
    %71 = vector.load %arg2[%70, %c0_63] : memref<100x32xf32, #tpu.memory_space<vmem>>, vector<1x32xf32>
    %c3_64 = arith.constant 3 : index
    %c0_65 = arith.constant 0 : index
    %72 = memref.load %arg1[%c3_64, %c0_65] : memref<4x8xi32, #tpu.memory_space<smem>>
    %73 = arith.index_cast %72 : i32 to index
    %c0_66 = arith.constant 0 : index
    %74 = vector.load %arg2[%73, %c0_66] : memref<100x32xf32, #tpu.memory_space<vmem>>, vector<1x32xf32>
    %c3_67 = arith.constant 3 : index
    %c1_68 = arith.constant 1 : index
    %75 = memref.load %arg1[%c3_67, %c1_68] : memref<4x8xi32, #tpu.memory_space<smem>>
    %76 = arith.index_cast %75 : i32 to index
    %c0_69 = arith.constant 0 : index
    %77 = vector.load %arg2[%76, %c0_69] : memref<100x32xf32, #tpu.memory_space<vmem>>, vector<1x32xf32>
    %c3_70 = arith.constant 3 : index
    %c2_71 = arith.constant 2 : index
    %78 = memref.load %arg1[%c3_70, %c2_71] : memref<4x8xi32, #tpu.memory_space<smem>>
    %79 = arith.index_cast %78 : i32 to index
    %c0_72 = arith.constant 0 : index
    %80 = vector.load %arg2[%79, %c0_72] : memref<100x32xf32, #tpu.memory_space<vmem>>, vector<1x32xf32>
    %c3_73 = arith.constant 3 : index
    %c3_74 = arith.constant 3 : index
    %81 = memref.load %arg1[%c3_73, %c3_74] : memref<4x8xi32, #tpu.memory_space<smem>>
    %82 = arith.index_cast %81 : i32 to index
    %c0_75 = arith.constant 0 : index
    %83 = vector.load %arg2[%82, %c0_75] : memref<100x32xf32, #tpu.memory_space<vmem>>, vector<1x32xf32>
    %c3_76 = arith.constant 3 : index
    %c4_77 = arith.constant 4 : index
    %84 = memref.load %arg1[%c3_76, %c4_77] : memref<4x8xi32, #tpu.memory_space<smem>>
    %85 = arith.index_cast %84 : i32 to index
    %c0_78 = arith.constant 0 : index
    %86 = vector.load %arg2[%85, %c0_78] : memref<100x32xf32, #tpu.memory_space<vmem>>, vector<1x32xf32>
    %c3_79 = arith.constant 3 : index
    %c5_80 = arith.constant 5 : index
    %87 = memref.load %arg1[%c3_79, %c5_80] : memref<4x8xi32, #tpu.memory_space<smem>>
    %88 = arith.index_cast %87 : i32 to index
    %c0_81 = arith.constant 0 : index
    %89 = vector.load %arg2[%88, %c0_81] : memref<100x32xf32, #tpu.memory_space<vmem>>, vector<1x32xf32>
    %c3_82 = arith.constant 3 : index
    %c6_83 = arith.constant 6 : index
    %90 = memref.load %arg1[%c3_82, %c6_83] : memref<4x8xi32, #tpu.memory_space<smem>>
    %91 = arith.index_cast %90 : i32 to index
    %c0_84 = arith.constant 0 : index
    %92 = vector.load %arg2[%91, %c0_84] : memref<100x32xf32, #tpu.memory_space<vmem>>, vector<1x32xf32>
    %c3_85 = arith.constant 3 : index
    %c7_86 = arith.constant 7 : index
    %93 = memref.load %arg1[%c3_85, %c7_86] : memref<4x8xi32, #tpu.memory_space<smem>>
    %94 = arith.index_cast %93 : i32 to index
    %c0_87 = arith.constant 0 : index
    %95 = vector.load %arg2[%94, %c0_87] : memref<100x32xf32, #tpu.memory_space<vmem>>, vector<1x32xf32>
    %96 = tpu.concatenate %2, %26, %50, %74, %5, %29, %53, %77, %8, %32, %56, %80, %11, %35, %59, %83 in 0 : vector<1x32xf32>, vector<1x32xf32>, vector<1x32xf32>, vector<1x32xf32>, vector<1x32xf32>, vector<1x32xf32>, vector<1x32xf32>, vector<1x32xf32>, vector<1x32xf32>, vector<1x32xf32>, vector<1x32xf32>, vector<1x32xf32>, vector<1x32xf32>, vector<1x32xf32>, vector<1x32xf32>, vector<1x32xf32> -> vector<16x32xf32>
    %97 = tpu.concatenate %14, %38, %62, %86, %17, %41, %65, %89, %20, %44, %68, %92, %23, %47, %71, %95 in 0 : vector<1x32xf32>, vector<1x32xf32>, vector<1x32xf32>, vector<1x32xf32>, vector<1x32xf32>, vector<1x32xf32>, vector<1x32xf32>, vector<1x32xf32>, vector<1x32xf32>, vector<1x32xf32>, vector<1x32xf32>, vector<1x32xf32>, vector<1x32xf32>, vector<1x32xf32>, vector<1x32xf32>, vector<1x32xf32> -> vector<16x32xf32>
    %98 = tpu.concatenate %96, %97 in 0 : vector<16x32xf32>, vector<16x32xf32> -> vector<32x32xf32>
    %99 = tpu.concatenate %23, %47, %71, %95, %20, %44, %68, %92, %17, %41, %65, %89, %14, %38, %62, %86 in 0 : vector<1x32xf32>, vector<1x32xf32>, vector<1x32xf32>, vector<1x32xf32>, vector<1x32xf32>, vector<1x32xf32>, vector<1x32xf32>, vector<1x32xf32>, vector<1x32xf32>, vector<1x32xf32>, vector<1x32xf32>, vector<1x32xf32>, vector<1x32xf32>, vector<1x32xf32>, vector<1x32xf32>, vector<1x32xf32> -> vector<16x32xf32>
    %100 = tpu.concatenate %11, %35, %59, %83, %8, %32, %56, %80, %5, %29, %53, %77, %2, %26, %50, %74 in 0 : vector<1x32xf32>, vector<1x32xf32>, vector<1x32xf32>, vector<1x32xf32>, vector<1x32xf32>, vector<1x32xf32>, vector<1x32xf32>, vector<1x32xf32>, vector<1x32xf32>, vector<1x32xf32>, vector<1x32xf32>, vector<1x32xf32>, vector<1x32xf32>, vector<1x32xf32>, vector<1x32xf32>, vector<1x32xf32> -> vector<16x32xf32>
    %101 = tpu.concatenate %99, %100 in 0 : vector<16x32xf32>, vector<16x32xf32> -> vector<32x32xf32>
    %102 = tpu.concatenate %98, %101 in 1 : vector<32x32xf32>, vector<32x32xf32> -> vector<32x64xf32>
    %c0_88 = arith.constant 0 : index
    %c0_89 = arith.constant 0 : index
    %103 = vector.load %arg3[%c0_88, %c0_89] : memref<64x128xf32, #tpu.memory_space<vmem>>, vector<64x128xf32>
    %cst = arith.constant dense<0.000000e+00> : vector<32x128xf32>
    %104 = tpu.matmul %102, %103, %cst {dimension_numbers = #tpu.dot_dimension_numbers<[1], [0], [0], [1], [0, 0, 1, 1], [], []>} : vector<32x64xf32>, vector<64x128xf32>, vector<32x128xf32> -> vector<32x128xf32>
    %c0_90 = arith.constant 0 : index
    %c0_91 = arith.constant 0 : index
    %105 = vector.load %arg5[%c0_90, %c0_91] : memref<1x128xf32, #tpu.memory_space<vmem>>, vector<1x128xf32>
    %106 = vector.broadcast %105 : vector<1x128xf32> to vector<32x128xf32>
    %107 = arith.addf %104, %106 : vector<32x128xf32>
    %c0_92 = arith.constant 0 : index
    %c0_93 = arith.constant 0 : index
    %108 = vector.load %arg4[%c0_92, %c0_93] : memref<32x128xf32, #tpu.memory_space<vmem>>, vector<32x128xf32>
    %cst_94 = arith.constant 0.000000e+00 : f32
    %109 = vector.broadcast %cst_94 : f32 to vector<4x32xf32>
    %cst_95 = arith.constant 0.000000e+00 : f32
    %110 = vector.broadcast %cst_95 : f32 to vector<4x32xf32>
    %111 = vector.extract_strided_slice %107 {offsets = [0, 0], sizes = [4, 128], strides = [1, 1]} : vector<32x128xf32> to vector<4x128xf32>
    %cst_96 = arith.constant dense<0.000000e+00> : vector<4x128xf32>
    %112 = tpu.matmul %109, %108, %cst_96 {dimension_numbers = #tpu.dot_dimension_numbers<[1], [0], [0], [1], [0, 0, 1, 1], [], []>} : vector<4x32xf32>, vector<32x128xf32>, vector<4x128xf32> -> vector<4x128xf32>
    %113 = arith.addf %111, %112 : vector<4x128xf32>
    %114 = arith.negf %113 : vector<4x128xf32>
    %115 = math.exp %114 : vector<4x128xf32>
    %cst_97 = arith.constant 1.000000e+00 : f32
    %116 = vector.broadcast %cst_97 : f32 to vector<4x128xf32>
    %117 = arith.addf %116, %115 : vector<4x128xf32>
    %118 = arith.divf %116, %117 : vector<4x128xf32>
    %119 = vector.extract_strided_slice %118 {offsets = [0, 0], sizes = [4, 32], strides = [1, 1]} : vector<4x128xf32> to vector<4x32xf32>
    %120 = vector.extract_strided_slice %118 {offsets = [0, 32], sizes = [4, 32], strides = [1, 1]} : vector<4x128xf32> to vector<4x32xf32>
    %121 = vector.extract_strided_slice %113 {offsets = [0, 64], sizes = [4, 32], strides = [1, 1]} : vector<4x128xf32> to vector<4x32xf32>
    %122 = math.tanh %121 : vector<4x32xf32>
    %123 = vector.extract_strided_slice %118 {offsets = [0, 96], sizes = [4, 32], strides = [1, 1]} : vector<4x128xf32> to vector<4x32xf32>
    %124 = arith.mulf %120, %110 : vector<4x32xf32>
    %125 = arith.mulf %119, %122 : vector<4x32xf32>
    %126 = arith.addf %124, %125 : vector<4x32xf32>
    %127 = math.tanh %126 : vector<4x32xf32>
    %128 = arith.mulf %123, %127 : vector<4x32xf32>
    %129 = vector.extract_strided_slice %107 {offsets = [4, 0], sizes = [4, 128], strides = [1, 1]} : vector<32x128xf32> to vector<4x128xf32>
    %cst_98 = arith.constant dense<0.000000e+00> : vector<4x128xf32>
    %130 = tpu.matmul %128, %108, %cst_98 {dimension_numbers = #tpu.dot_dimension_numbers<[1], [0], [0], [1], [0, 0, 1, 1], [], []>} : vector<4x32xf32>, vector<32x128xf32>, vector<4x128xf32> -> vector<4x128xf32>
    %131 = arith.addf %129, %130 : vector<4x128xf32>
    %132 = arith.negf %131 : vector<4x128xf32>
    %133 = math.exp %132 : vector<4x128xf32>
    %cst_99 = arith.constant 1.000000e+00 : f32
    %134 = vector.broadcast %cst_99 : f32 to vector<4x128xf32>
    %135 = arith.addf %134, %133 : vector<4x128xf32>
    %136 = arith.divf %134, %135 : vector<4x128xf32>
    %137 = vector.extract_strided_slice %136 {offsets = [0, 0], sizes = [4, 32], strides = [1, 1]} : vector<4x128xf32> to vector<4x32xf32>
    %138 = vector.extract_strided_slice %136 {offsets = [0, 32], sizes = [4, 32], strides = [1, 1]} : vector<4x128xf32> to vector<4x32xf32>
    %139 = vector.extract_strided_slice %131 {offsets = [0, 64], sizes = [4, 32], strides = [1, 1]} : vector<4x128xf32> to vector<4x32xf32>
    %140 = math.tanh %139 : vector<4x32xf32>
    %141 = vector.extract_strided_slice %136 {offsets = [0, 96], sizes = [4, 32], strides = [1, 1]} : vector<4x128xf32> to vector<4x32xf32>
    %142 = arith.mulf %138, %126 : vector<4x32xf32>
    %143 = arith.mulf %137, %140 : vector<4x32xf32>
    %144 = arith.addf %142, %143 : vector<4x32xf32>
    %145 = math.tanh %144 : vector<4x32xf32>
    %146 = arith.mulf %141, %145 : vector<4x32xf32>
    %147 = vector.extract_strided_slice %107 {offsets = [8, 0], sizes = [4, 128], strides = [1, 1]} : vector<32x128xf32> to vector<4x128xf32>
    %cst_100 = arith.constant dense<0.000000e+00> : vector<4x128xf32>
    %148 = tpu.matmul %146, %108, %cst_100 {dimension_numbers = #tpu.dot_dimension_numbers<[1], [0], [0], [1], [0, 0, 1, 1], [], []>} : vector<4x32xf32>, vector<32x128xf32>, vector<4x128xf32> -> vector<4x128xf32>
    %149 = arith.addf %147, %148 : vector<4x128xf32>
    %150 = arith.negf %149 : vector<4x128xf32>
    %151 = math.exp %150 : vector<4x128xf32>
    %cst_101 = arith.constant 1.000000e+00 : f32
    %152 = vector.broadcast %cst_101 : f32 to vector<4x128xf32>
    %153 = arith.addf %152, %151 : vector<4x128xf32>
    %154 = arith.divf %152, %153 : vector<4x128xf32>
    %155 = vector.extract_strided_slice %154 {offsets = [0, 0], sizes = [4, 32], strides = [1, 1]} : vector<4x128xf32> to vector<4x32xf32>
    %156 = vector.extract_strided_slice %154 {offsets = [0, 32], sizes = [4, 32], strides = [1, 1]} : vector<4x128xf32> to vector<4x32xf32>
    %157 = vector.extract_strided_slice %149 {offsets = [0, 64], sizes = [4, 32], strides = [1, 1]} : vector<4x128xf32> to vector<4x32xf32>
    %158 = math.tanh %157 : vector<4x32xf32>
    %159 = vector.extract_strided_slice %154 {offsets = [0, 96], sizes = [4, 32], strides = [1, 1]} : vector<4x128xf32> to vector<4x32xf32>
    %160 = arith.mulf %156, %144 : vector<4x32xf32>
    %161 = arith.mulf %155, %158 : vector<4x32xf32>
    %162 = arith.addf %160, %161 : vector<4x32xf32>
    %163 = math.tanh %162 : vector<4x32xf32>
    %164 = arith.mulf %159, %163 : vector<4x32xf32>
    %165 = vector.extract_strided_slice %107 {offsets = [12, 0], sizes = [4, 128], strides = [1, 1]} : vector<32x128xf32> to vector<4x128xf32>
    %cst_102 = arith.constant dense<0.000000e+00> : vector<4x128xf32>
    %166 = tpu.matmul %164, %108, %cst_102 {dimension_numbers = #tpu.dot_dimension_numbers<[1], [0], [0], [1], [0, 0, 1, 1], [], []>} : vector<4x32xf32>, vector<32x128xf32>, vector<4x128xf32> -> vector<4x128xf32>
    %167 = arith.addf %165, %166 : vector<4x128xf32>
    %168 = arith.negf %167 : vector<4x128xf32>
    %169 = math.exp %168 : vector<4x128xf32>
    %cst_103 = arith.constant 1.000000e+00 : f32
    %170 = vector.broadcast %cst_103 : f32 to vector<4x128xf32>
    %171 = arith.addf %170, %169 : vector<4x128xf32>
    %172 = arith.divf %170, %171 : vector<4x128xf32>
    %173 = vector.extract_strided_slice %172 {offsets = [0, 0], sizes = [4, 32], strides = [1, 1]} : vector<4x128xf32> to vector<4x32xf32>
    %174 = vector.extract_strided_slice %172 {offsets = [0, 32], sizes = [4, 32], strides = [1, 1]} : vector<4x128xf32> to vector<4x32xf32>
    %175 = vector.extract_strided_slice %167 {offsets = [0, 64], sizes = [4, 32], strides = [1, 1]} : vector<4x128xf32> to vector<4x32xf32>
    %176 = math.tanh %175 : vector<4x32xf32>
    %177 = vector.extract_strided_slice %172 {offsets = [0, 96], sizes = [4, 32], strides = [1, 1]} : vector<4x128xf32> to vector<4x32xf32>
    %178 = arith.mulf %174, %162 : vector<4x32xf32>
    %179 = arith.mulf %173, %176 : vector<4x32xf32>
    %180 = arith.addf %178, %179 : vector<4x32xf32>
    %181 = math.tanh %180 : vector<4x32xf32>
    %182 = arith.mulf %177, %181 : vector<4x32xf32>
    %183 = vector.extract_strided_slice %107 {offsets = [16, 0], sizes = [4, 128], strides = [1, 1]} : vector<32x128xf32> to vector<4x128xf32>
    %cst_104 = arith.constant dense<0.000000e+00> : vector<4x128xf32>
    %184 = tpu.matmul %182, %108, %cst_104 {dimension_numbers = #tpu.dot_dimension_numbers<[1], [0], [0], [1], [0, 0, 1, 1], [], []>} : vector<4x32xf32>, vector<32x128xf32>, vector<4x128xf32> -> vector<4x128xf32>
    %185 = arith.addf %183, %184 : vector<4x128xf32>
    %186 = arith.negf %185 : vector<4x128xf32>
    %187 = math.exp %186 : vector<4x128xf32>
    %cst_105 = arith.constant 1.000000e+00 : f32
    %188 = vector.broadcast %cst_105 : f32 to vector<4x128xf32>
    %189 = arith.addf %188, %187 : vector<4x128xf32>
    %190 = arith.divf %188, %189 : vector<4x128xf32>
    %191 = vector.extract_strided_slice %190 {offsets = [0, 0], sizes = [4, 32], strides = [1, 1]} : vector<4x128xf32> to vector<4x32xf32>
    %192 = vector.extract_strided_slice %190 {offsets = [0, 32], sizes = [4, 32], strides = [1, 1]} : vector<4x128xf32> to vector<4x32xf32>
    %193 = vector.extract_strided_slice %185 {offsets = [0, 64], sizes = [4, 32], strides = [1, 1]} : vector<4x128xf32> to vector<4x32xf32>
    %194 = math.tanh %193 : vector<4x32xf32>
    %195 = vector.extract_strided_slice %190 {offsets = [0, 96], sizes = [4, 32], strides = [1, 1]} : vector<4x128xf32> to vector<4x32xf32>
    %196 = arith.mulf %192, %180 : vector<4x32xf32>
    %197 = arith.mulf %191, %194 : vector<4x32xf32>
    %198 = arith.addf %196, %197 : vector<4x32xf32>
    %199 = math.tanh %198 : vector<4x32xf32>
    %200 = arith.mulf %195, %199 : vector<4x32xf32>
    %201 = vector.extract_strided_slice %107 {offsets = [20, 0], sizes = [4, 128], strides = [1, 1]} : vector<32x128xf32> to vector<4x128xf32>
    %cst_106 = arith.constant dense<0.000000e+00> : vector<4x128xf32>
    %202 = tpu.matmul %200, %108, %cst_106 {dimension_numbers = #tpu.dot_dimension_numbers<[1], [0], [0], [1], [0, 0, 1, 1], [], []>} : vector<4x32xf32>, vector<32x128xf32>, vector<4x128xf32> -> vector<4x128xf32>
    %203 = arith.addf %201, %202 : vector<4x128xf32>
    %204 = arith.negf %203 : vector<4x128xf32>
    %205 = math.exp %204 : vector<4x128xf32>
    %cst_107 = arith.constant 1.000000e+00 : f32
    %206 = vector.broadcast %cst_107 : f32 to vector<4x128xf32>
    %207 = arith.addf %206, %205 : vector<4x128xf32>
    %208 = arith.divf %206, %207 : vector<4x128xf32>
    %209 = vector.extract_strided_slice %208 {offsets = [0, 0], sizes = [4, 32], strides = [1, 1]} : vector<4x128xf32> to vector<4x32xf32>
    %210 = vector.extract_strided_slice %208 {offsets = [0, 32], sizes = [4, 32], strides = [1, 1]} : vector<4x128xf32> to vector<4x32xf32>
    %211 = vector.extract_strided_slice %203 {offsets = [0, 64], sizes = [4, 32], strides = [1, 1]} : vector<4x128xf32> to vector<4x32xf32>
    %212 = math.tanh %211 : vector<4x32xf32>
    %213 = vector.extract_strided_slice %208 {offsets = [0, 96], sizes = [4, 32], strides = [1, 1]} : vector<4x128xf32> to vector<4x32xf32>
    %214 = arith.mulf %210, %198 : vector<4x32xf32>
    %215 = arith.mulf %209, %212 : vector<4x32xf32>
    %216 = arith.addf %214, %215 : vector<4x32xf32>
    %217 = math.tanh %216 : vector<4x32xf32>
    %218 = arith.mulf %213, %217 : vector<4x32xf32>
    %219 = vector.extract_strided_slice %107 {offsets = [24, 0], sizes = [4, 128], strides = [1, 1]} : vector<32x128xf32> to vector<4x128xf32>
    %cst_108 = arith.constant dense<0.000000e+00> : vector<4x128xf32>
    %220 = tpu.matmul %218, %108, %cst_108 {dimension_numbers = #tpu.dot_dimension_numbers<[1], [0], [0], [1], [0, 0, 1, 1], [], []>} : vector<4x32xf32>, vector<32x128xf32>, vector<4x128xf32> -> vector<4x128xf32>
    %221 = arith.addf %219, %220 : vector<4x128xf32>
    %222 = arith.negf %221 : vector<4x128xf32>
    %223 = math.exp %222 : vector<4x128xf32>
    %cst_109 = arith.constant 1.000000e+00 : f32
    %224 = vector.broadcast %cst_109 : f32 to vector<4x128xf32>
    %225 = arith.addf %224, %223 : vector<4x128xf32>
    %226 = arith.divf %224, %225 : vector<4x128xf32>
    %227 = vector.extract_strided_slice %226 {offsets = [0, 0], sizes = [4, 32], strides = [1, 1]} : vector<4x128xf32> to vector<4x32xf32>
    %228 = vector.extract_strided_slice %226 {offsets = [0, 32], sizes = [4, 32], strides = [1, 1]} : vector<4x128xf32> to vector<4x32xf32>
    %229 = vector.extract_strided_slice %221 {offsets = [0, 64], sizes = [4, 32], strides = [1, 1]} : vector<4x128xf32> to vector<4x32xf32>
    %230 = math.tanh %229 : vector<4x32xf32>
    %231 = vector.extract_strided_slice %226 {offsets = [0, 96], sizes = [4, 32], strides = [1, 1]} : vector<4x128xf32> to vector<4x32xf32>
    %232 = arith.mulf %228, %216 : vector<4x32xf32>
    %233 = arith.mulf %227, %230 : vector<4x32xf32>
    %234 = arith.addf %232, %233 : vector<4x32xf32>
    %235 = math.tanh %234 : vector<4x32xf32>
    %236 = arith.mulf %231, %235 : vector<4x32xf32>
    %237 = vector.extract_strided_slice %107 {offsets = [28, 0], sizes = [4, 128], strides = [1, 1]} : vector<32x128xf32> to vector<4x128xf32>
    %cst_110 = arith.constant dense<0.000000e+00> : vector<4x128xf32>
    %238 = tpu.matmul %236, %108, %cst_110 {dimension_numbers = #tpu.dot_dimension_numbers<[1], [0], [0], [1], [0, 0, 1, 1], [], []>} : vector<4x32xf32>, vector<32x128xf32>, vector<4x128xf32> -> vector<4x128xf32>
    %239 = arith.addf %237, %238 : vector<4x128xf32>
    %240 = arith.negf %239 : vector<4x128xf32>
    %241 = math.exp %240 : vector<4x128xf32>
    %cst_111 = arith.constant 1.000000e+00 : f32
    %242 = vector.broadcast %cst_111 : f32 to vector<4x128xf32>
    %243 = arith.addf %242, %241 : vector<4x128xf32>
    %244 = arith.divf %242, %243 : vector<4x128xf32>
    %245 = vector.extract_strided_slice %244 {offsets = [0, 0], sizes = [4, 32], strides = [1, 1]} : vector<4x128xf32> to vector<4x32xf32>
    %246 = vector.extract_strided_slice %244 {offsets = [0, 32], sizes = [4, 32], strides = [1, 1]} : vector<4x128xf32> to vector<4x32xf32>
    %247 = vector.extract_strided_slice %239 {offsets = [0, 64], sizes = [4, 32], strides = [1, 1]} : vector<4x128xf32> to vector<4x32xf32>
    %248 = math.tanh %247 : vector<4x32xf32>
    %249 = vector.extract_strided_slice %244 {offsets = [0, 96], sizes = [4, 32], strides = [1, 1]} : vector<4x128xf32> to vector<4x32xf32>
    %250 = arith.mulf %246, %234 : vector<4x32xf32>
    %251 = arith.mulf %245, %248 : vector<4x32xf32>
    %252 = arith.addf %250, %251 : vector<4x32xf32>
    %253 = math.tanh %252 : vector<4x32xf32>
    %254 = arith.mulf %249, %253 : vector<4x32xf32>
    %255 = vector.extract_strided_slice %128 {offsets = [0, 0], sizes = [4, 16], strides = [1, 1]} : vector<4x32xf32> to vector<4x16xf32>
    %256 = vector.extract_strided_slice %254 {offsets = [0, 16], sizes = [4, 16], strides = [1, 1]} : vector<4x32xf32> to vector<4x16xf32>
    %257 = vector.extract_strided_slice %146 {offsets = [0, 0], sizes = [4, 16], strides = [1, 1]} : vector<4x32xf32> to vector<4x16xf32>
    %258 = vector.extract_strided_slice %236 {offsets = [0, 16], sizes = [4, 16], strides = [1, 1]} : vector<4x32xf32> to vector<4x16xf32>
    %259 = vector.extract_strided_slice %164 {offsets = [0, 0], sizes = [4, 16], strides = [1, 1]} : vector<4x32xf32> to vector<4x16xf32>
    %260 = vector.extract_strided_slice %218 {offsets = [0, 16], sizes = [4, 16], strides = [1, 1]} : vector<4x32xf32> to vector<4x16xf32>
    %261 = vector.extract_strided_slice %182 {offsets = [0, 0], sizes = [4, 16], strides = [1, 1]} : vector<4x32xf32> to vector<4x16xf32>
    %262 = vector.extract_strided_slice %200 {offsets = [0, 16], sizes = [4, 16], strides = [1, 1]} : vector<4x32xf32> to vector<4x16xf32>
    %263 = vector.extract_strided_slice %200 {offsets = [0, 0], sizes = [4, 16], strides = [1, 1]} : vector<4x32xf32> to vector<4x16xf32>
    %264 = vector.extract_strided_slice %182 {offsets = [0, 16], sizes = [4, 16], strides = [1, 1]} : vector<4x32xf32> to vector<4x16xf32>
    %265 = vector.extract_strided_slice %218 {offsets = [0, 0], sizes = [4, 16], strides = [1, 1]} : vector<4x32xf32> to vector<4x16xf32>
    %266 = vector.extract_strided_slice %164 {offsets = [0, 16], sizes = [4, 16], strides = [1, 1]} : vector<4x32xf32> to vector<4x16xf32>
    %267 = vector.extract_strided_slice %236 {offsets = [0, 0], sizes = [4, 16], strides = [1, 1]} : vector<4x32xf32> to vector<4x16xf32>
    %268 = vector.extract_strided_slice %146 {offsets = [0, 16], sizes = [4, 16], strides = [1, 1]} : vector<4x32xf32> to vector<4x16xf32>
    %269 = vector.extract_strided_slice %254 {offsets = [0, 0], sizes = [4, 16], strides = [1, 1]} : vector<4x32xf32> to vector<4x16xf32>
    %270 = vector.extract_strided_slice %128 {offsets = [0, 16], sizes = [4, 16], strides = [1, 1]} : vector<4x32xf32> to vector<4x16xf32>
    %271 = tpu.concatenate %255, %256, %257, %258, %259, %260, %261, %262, %263, %264, %265, %266, %267, %268, %269, %270 in 1 : vector<4x16xf32>, vector<4x16xf32>, vector<4x16xf32>, vector<4x16xf32>, vector<4x16xf32>, vector<4x16xf32>, vector<4x16xf32>, vector<4x16xf32>, vector<4x16xf32>, vector<4x16xf32>, vector<4x16xf32>, vector<4x16xf32>, vector<4x16xf32>, vector<4x16xf32>, vector<4x16xf32>, vector<4x16xf32> -> vector<4x256xf32>
    %c0_112 = arith.constant 0 : index
    %c0_113 = arith.constant 0 : index
    %272 = vector.load %arg6[%c0_112, %c0_113] : memref<4x256xf32, #tpu.memory_space<vmem>>, vector<4x256xf32>
    tpu.vector_store %arg6[%c0_112, %c0_113], %271 {strides = array<i32>} : memref<4x256xf32, #tpu.memory_space<vmem>>, vector<4x256xf32>,
    return
  }
  func.func @transform_0(%arg0: i32, %arg1: memref<4x8xi32, #tpu.memory_space<smem>>) -> (i32, i32) {
    %c0_i32 = arith.constant 0 : i32
    %c0_i32_0 = arith.constant 0 : i32
    %c0_i32_1 = arith.constant 0 : i32
    return %c0_i32, %c0_i32_0 : i32, i32
  }
  func.func @transform_1(%arg0: i32, %arg1: memref<4x8xi32, #tpu.memory_space<smem>>) -> (i32, i32) {
    %c0_i32 = arith.constant 0 : i32
    %c0_i32_0 = arith.constant 0 : i32
    %c0_i32_1 = arith.constant 0 : i32
    return %c0_i32, %c0_i32_0 : i32, i32
  }
  func.func @transform_2(%arg0: i32, %arg1: memref<4x8xi32, #tpu.memory_space<smem>>) -> (i32, i32) {
    %c0_i32 = arith.constant 0 : i32
    %c0_i32_0 = arith.constant 0 : i32
    %c0_i32_1 = arith.constant 0 : i32
    return %c0_i32, %c0_i32_0 : i32, i32
  }
  func.func @transform_3(%arg0: i32, %arg1: memref<4x8xi32, #tpu.memory_space<smem>>) -> (i32, i32) {
    %c0_i32 = arith.constant 0 : i32
    %c0_i32_0 = arith.constant 0 : i32
    %c0_i32_1 = arith.constant 0 : i32
    return %c0_i32, %c0_i32_0 : i32, i32
  }
  func.func @transform_4(%arg0: i32, %arg1: memref<4x8xi32, #tpu.memory_space<smem>>) -> (i32, i32) {
    %c0_i32 = arith.constant 0 : i32
    %c0_i32_0 = arith.constant 0 : i32
    %c0_i32_1 = arith.constant 0 : i32
    return %c0_i32, %c0_i32_0 : i32, i32
  }
}

</mosaic_0001>

<llo_original>
// kernel: tpu_custom_call.1
$region0: #{tpu_custom_call.1}
  #allocation0 [shape = 'u32[]', space=smem, size = 0x4, offset = 0x4, fixed_abs, tag = 'smem constant byte address 0x4 - core index']
  #allocation1 [shape = 'u32[72,128]{1,0:T(1,128)}', space=vmem, size = 0x9000, scoped, tag = 'internal scratch']
  #allocation2 [shape = 's32[1]{0}', space=sflag, size = 0x4, scoped, tag = 'scoped memory for tpu_custom_call.1']
  #allocation3 [shape = 'u8[2048]{0}', space=smem, size = 0x800, scoped, tag = 'prefetched SMEM operand 0']
  %s0 = inlined_call_operand.vmem [shape: s32[4,8], index: 0, kind: input, shape index: {}]
  %s1 = inlined_call_operand.vmem [shape: f32[100,32], index: 1, kind: input, shape index: {}]
  %s2 = inlined_call_operand.vmem [shape: f32[64,128], index: 2, kind: input, shape index: {}]
  %s3 = inlined_call_operand.vmem [shape: f32[32,128], index: 3, kind: input, shape index: {}]
  %s4 = inlined_call_operand.vmem [shape: f32[1,128], index: 4, kind: input, shape index: {}]
  %s5 = inlined_call_operand.hbm [shape: f32[4,256], index: 5, kind: output, shape index: {}]
  %s6 = sld [smem:[#allocation0]]
  $region26: #{tpu_custom_call.1} parent=0
    _
  %s8 = ssub.s32 1, %s6
  %s9 = scalar_select 0, %s8, %s6
  %s11 = sshll.u32 %s0, 4
  %s12 = int_to_ptr.vmem [resolvable:$true] %s11
  %14 = dma.vmem_to_smem %s12, 64, [#allocation3], [#allocation2]
  %16 = dma.done [#allocation2], 64
  %17 = sfence
  $region1: #{tpu_custom_call.1} parent=0
    #allocation4 [shape = 'u8[4096]{0}', space=vmem, size = 0x1000, scoped, tag = 'output window, operand 0, single buffered']
    #allocation5 [shape = 's32[1]{0}', space=sflag, size = 0x4, scoped, tag = 'scoped memory for tpu_custom_call.1']
    %18 = vsyncpa [#allocation5], 0
    // Predicated region
    $region2: #{tpu_custom_call.1} parent=1 // pred_check
      _
    $region3: #{tpu_custom_call.1} parent=1 // pred_check_branch
      %20 = sbr.rel (0) target = $region5
    $region4: #{tpu_custom_call.1} parent=1 // pred_region
      _
    $region5: #{tpu_custom_call.1} parent=1 // pred_fallthru
      _
    // Predicated region
    $region6: #{tpu_custom_call.1} parent=1 // pred_check
      _
    $region7: #{tpu_custom_call.1} parent=1 // pred_check_branch
      %22 = sbr.rel (0) target = $region9
    $region8: #{tpu_custom_call.1} parent=1 // pred_region
      _
    $region9: #{tpu_custom_call.1} parent=1 // pred_fallthru
      _
    // Predicated region
    $region10: #{tpu_custom_call.1} parent=1 // pred_check
      _
    $region11: #{tpu_custom_call.1} parent=1 // pred_check_branch
      %24 = sbr.rel (0) target = $region13
    $region12: #{tpu_custom_call.1} parent=1 // pred_region
      _
    $region13: #{tpu_custom_call.1} parent=1 // pred_fallthru
      _
    // Predicated region
    $region14: #{tpu_custom_call.1} parent=1 // pred_check
      _
    $region15: #{tpu_custom_call.1} parent=1 // pred_check_branch
      %26 = sbr.rel (0) target = $region17
    $region16: #{tpu_custom_call.1} parent=1 // pred_region
      _
    $region17: #{tpu_custom_call.1} parent=1 // pred_fallthru
      _
    %s27 = sld [smem:[#allocation3]]
    %s28 = scalar_lea.vmem %s1, %s27
    %v29 = vld [vmem:[%s28] sm:$0x1]
    %s30 = sld [smem:[#allocation3 + $0x1]]
    %s31 = scalar_lea.vmem %s1, %s30
    %v32 = vld [vmem:[%s31] sm:$0x1]
    %s33 = sld [smem:[#allocation3 + $0x2]]
    %s34 = scalar_lea.vmem %s1, %s33
    %v35 = vld [vmem:[%s34] sm:$0x1]
    %s36 = sld [smem:[#allocation3 + $0x3]]
    %s37 = scalar_lea.vmem %s1, %s36
    %v38 = vld [vmem:[%s37] sm:$0x1]
    %s39 = sld [smem:[#allocation3 + $0x4]]
    %s40 = scalar_lea.vmem %s1, %s39
    %v41 = vld [vmem:[%s40] sm:$0x1]
    %s42 = sld [smem:[#allocation3 + $0x5]]
    %s43 = scalar_lea.vmem %s1, %s42
    %v44 = vld [vmem:[%s43] sm:$0x1]
    %s45 = sld [smem:[#allocation3 + $0x6]]
    %s46 = scalar_lea.vmem %s1, %s45
    %v47 = vld [vmem:[%s46] sm:$0x1]
    %s48 = sld [smem:[#allocation3 + $0x7]]
    %s49 = scalar_lea.vmem %s1, %s48
    %v50 = vld [vmem:[%s49] sm:$0x1]
    %s51 = sld [smem:[#allocation3 + $0x80]]
    %s52 = scalar_lea.vmem %s1, %s51
    %v53 = vld [vmem:[%s52] sm:$0x1]
    %s54 = sld [smem:[#allocation3 + $0x81]]
    %s55 = scalar_lea.vmem %s1, %s54
    %v56 = vld [vmem:[%s55] sm:$0x1]
    %s57 = sld [smem:[#allocation3 + $0x82]]
    %s58 = scalar_lea.vmem %s1, %s57
    %v59 = vld [vmem:[%s58] sm:$0x1]
    %s60 = sld [smem:[#allocation3 + $0x83]]
    %s61 = scalar_lea.vmem %s1, %s60
    %v62 = vld [vmem:[%s61] sm:$0x1]
    %s63 = sld [smem:[#allocation3 + $0x84]]
    %s64 = scalar_lea.vmem %s1, %s63
    %v65 = vld [vmem:[%s64] sm:$0x1]
    %s66 = sld [smem:[#allocation3 + $0x85]]
    %s67 = scalar_lea.vmem %s1, %s66
    %v68 = vld [vmem:[%s67] sm:$0x1]
    %s69 = sld [smem:[#allocation3 + $0x86]]
    %s70 = scalar_lea.vmem %s1, %s69
    %v71 = vld [vmem:[%s70] sm:$0x1]
    %s72 = sld [smem:[#allocation3 + $0x87]]
    %s73 = scalar_lea.vmem %s1, %s72
    %v74 = vld [vmem:[%s73] sm:$0x1]
    %s75 = sld [smem:[#allocation3 + $0x100]]
    %s76 = scalar_lea.vmem %s1, %s75
    %v77 = vld [vmem:[%s76] sm:$0x1]
    %s78 = sld [smem:[#allocation3 + $0x101]]
    %s79 = scalar_lea.vmem %s1, %s78
    %v80 = vld [vmem:[%s79] sm:$0x1]
    %s81 = sld [smem:[#allocation3 + $0x102]]
    %s82 = scalar_lea.vmem %s1, %s81
    %v83 = vld [vmem:[%s82] sm:$0x1]
    %s84 = sld [smem:[#allocation3 + $0x103]]
    %s85 = scalar_lea.vmem %s1, %s84
    %v86 = vld [vmem:[%s85] sm:$0x1]
    %s87 = sld [smem:[#allocation3 + $0x104]]
    %s88 = scalar_lea.vmem %s1, %s87
    %v89 = vld [vmem:[%s88] sm:$0x1]
    %s90 = sld [smem:[#allocation3 + $0x105]]
    %s91 = scalar_lea.vmem %s1, %s90
    %v92 = vld [vmem:[%s91] sm:$0x1]
    %s93 = sld [smem:[#allocation3 + $0x106]]
    %s94 = scalar_lea.vmem %s1, %s93
    %v95 = vld [vmem:[%s94] sm:$0x1]
    %s96 = sld [smem:[#allocation3 + $0x107]]
    %s97 = scalar_lea.vmem %s1, %s96
    %v98 = vld [vmem:[%s97] sm:$0x1]
    %s99 = sld [smem:[#allocation3 + $0x180]]
    %s100 = scalar_lea.vmem %s1, %s99
    %v101 = vld [vmem:[%s100] sm:$0x1]
    %s102 = sld [smem:[#allocation3 + $0x181]]
    %s103 = scalar_lea.vmem %s1, %s102
    %v104 = vld [vmem:[%s103] sm:$0x1]
    %s105 = sld [smem:[#allocation3 + $0x182]]
    %s106 = scalar_lea.vmem %s1, %s105
    %v107 = vld [vmem:[%s106] sm:$0x1]
    %s108 = sld [smem:[#allocation3 + $0x183]]
    %s109 = scalar_lea.vmem %s1, %s108
    %v110 = vld [vmem:[%s109] sm:$0x1]
    %s111 = sld [smem:[#allocation3 + $0x184]]
    %s112 = scalar_lea.vmem %s1, %s111
    %v113 = vld [vmem:[%s112] sm:$0x1]
    %s114 = sld [smem:[#allocation3 + $0x185]]
    %s115 = scalar_lea.vmem %s1, %s114
    %v116 = vld [vmem:[%s115] sm:$0x1]
    %s117 = sld [smem:[#allocation3 + $0x186]]
    %s118 = scalar_lea.vmem %s1, %s117
    %v119 = vld [vmem:[%s118] sm:$0x1]
    %s120 = sld [smem:[#allocation3 + $0x187]]
    %s121 = scalar_lea.vmem %s1, %s120
    %v122 = vld [vmem:[%s121] sm:$0x1]
    %v124 = vrot.slane %v53, 7
    %v127 = vrot.slane %v77, 6
    %v130 = vrot.slane %v101, 5
    %v133 = vrot.slane %v32, 4
    %v136 = vrot.slane %v56, 3
    %v139 = vrot.slane %v80, 2
    %v142 = vrot.slane %v104, 1
    %v145 = vrot.slane %v59, 7
    %v148 = vrot.slane %v83, 6
    %v151 = vrot.slane %v107, 5
    %v154 = vrot.slane %v38, 4
    %v157 = vrot.slane %v62, 3
    %v160 = vrot.slane %v86, 2
    %v163 = vrot.slane %v110, 1
    %vm165 = vcmask 1040384
    %v166 = vsel %vm165, %v29, %v124
    %vm167 = vcmask 1041408
    %v168 = vsel %vm167, %v166, %v127
    %vm169 = vcmask 1042432
    %v170 = vsel %vm169, %v168, %v130
    %vm171 = vcmask 1043456
    %v172 = vsel %vm171, %v170, %v133
    %vm173 = vcmask 1044480
    %v174 = vsel %vm173, %v172, %v136
    %vm175 = vcmask 1045504
    %v176 = vsel %vm175, %v174, %v139
    %vm177 = vcmask 1046528
    %v178 = vsel %vm177, %v176, %v142
    %v179 = vsel %vm165, %v35, %v145
    %v180 = vsel %vm167, %v179, %v148
    %v181 = vsel %vm169, %v180, %v151
    %v182 = vsel %vm171, %v181, %v154
    %v183 = vsel %vm173, %v182, %v157
    %v184 = vsel %vm175, %v183, %v160
    %v185 = vsel %vm177, %v184, %v163
    %v187 = vrot.slane %v65, 7
    %v190 = vrot.slane %v89, 6
    %v193 = vrot.slane %v113, 5
    %v196 = vrot.slane %v44, 4
    %v199 = vrot.slane %v68, 3
    %v202 = vrot.slane %v92, 2
    %v205 = vrot.slane %v116, 1
    %v208 = vrot.slane %v71, 7
    %v211 = vrot.slane %v95, 6
    %v214 = vrot.slane %v119, 5
    %v217 = vrot.slane %v50, 4
    %v220 = vrot.slane %v74, 3
    %v223 = vrot.slane %v98, 2
    %v226 = vrot.slane %v122, 1
    %v228 = vsel %vm165, %v41, %v187
    %v229 = vsel %vm167, %v228, %v190
    %v230 = vsel %vm169, %v229, %v193
    %v231 = vsel %vm171, %v230, %v196
    %v232 = vsel %vm173, %v231, %v199
    %v233 = vsel %vm175, %v232, %v202
    %v234 = vsel %vm177, %v233, %v205
    %v235 = vsel %vm165, %v47, %v208
    %v236 = vsel %vm167, %v235, %v211
    %v237 = vsel %vm169, %v236, %v214
    %v238 = vsel %vm171, %v237, %v217
    %v239 = vsel %vm173, %v238, %v220
    %v240 = vsel %vm175, %v239, %v223
    %v241 = vsel %vm177, %v240, %v226
    %v242 = vrot.slane %v74, 7
    %v244 = vrot.slane %v98, 6
    %v246 = vrot.slane %v122, 5
    %v249 = vrot.slane %v47, 4
    %v251 = vrot.slane %v71, 3
    %v253 = vrot.slane %v95, 2
    %v255 = vrot.slane %v119, 1
    %v257 = vrot.slane %v68, 7
    %v259 = vrot.slane %v92, 6
    %v261 = vrot.slane %v116, 5
    %v264 = vrot.slane %v41, 4
    %v266 = vrot.slane %v65, 3
    %v268 = vrot.slane %v89, 2
    %v270 = vrot.slane %v113, 1
    %v272 = vsel %vm165, %v50, %v242
    %v273 = vsel %vm167, %v272, %v244
    %v274 = vsel %vm169, %v273, %v246
    %v275 = vsel %vm171, %v274, %v249
    %v276 = vsel %vm173, %v275, %v251
    %v277 = vsel %vm175, %v276, %v253
    %v278 = vsel %vm177, %v277, %v255
    %v279 = vsel %vm165, %v44, %v257
    %v280 = vsel %vm167, %v279, %v259
    %v281 = vsel %vm169, %v280, %v261
    %v282 = vsel %vm171, %v281, %v264
    %v283 = vsel %vm173, %v282, %v266
    %v284 = vsel %vm175, %v283, %v268
    %v285 = vsel %vm177, %v284, %v270
    %v286 = vrot.slane %v62, 7
    %v288 = vrot.slane %v86, 6
    %v290 = vrot.slane %v110, 5
    %v293 = vrot.slane %v35, 4
    %v295 = vrot.slane %v59, 3
    %v297 = vrot.slane %v83, 2
    %v299 = vrot.slane %v107, 1
    %v301 = vrot.slane %v56, 7
    %v303 = vrot.slane %v80, 6
    %v305 = vrot.slane %v104, 5
    %v308 = vrot.slane %v29, 4
    %v310 = vrot.slane %v53, 3
    %v312 = vrot.slane %v77, 2
    %v314 = vrot.slane %v101, 1
    %v316 = vsel %vm165, %v38, %v286
    %v317 = vsel %vm167, %v316, %v288
    %v318 = vsel %vm169, %v317, %v290
    %v319 = vsel %vm171, %v318, %v293
    %v320 = vsel %vm173, %v319, %v295
    %v321 = vsel %vm175, %v320, %v297
    %v322 = vsel %vm177, %v321, %v299
    %v323 = vsel %vm165, %v32, %v301
    %v324 = vsel %vm167, %v323, %v303
    %v325 = vsel %vm169, %v324, %v305
    %v326 = vsel %vm171, %v325, %v308
    %v327 = vsel %vm173, %v326, %v310
    %v328 = vsel %vm175, %v327, %v312
    %v329 = vsel %vm177, %v328, %v314
    %334 = vrot.lane.b32.xlu0 %v278, 32
    %v335 = vpop.permute.xlu0 %334
    %336 = vrot.lane.b32.xlu0 %v285, 32
    %v337 = vpop.permute.xlu0 %336
    %338 = vrot.lane.b32.xlu0 %v322, 32
    %v339 = vpop.permute.xlu0 %338
    %340 = vrot.lane.b32.xlu0 %v329, 32
    %v341 = vpop.permute.xlu0 %340
    %vm346 = vcmask 261120
    %v347 = vsel %vm346, %v178, %v335
    %v348 = vsel %vm346, %v185, %v337
    %v349 = vsel %vm346, %v234, %v339
    %v350 = vsel %vm346, %v241, %v341
    %v351 = vld [vmem:[%s2] sm:$0xff]
    %v352 = vld [vmem:[%s2 + $0x8] sm:$0xff]
    %v353 = vld [vmem:[%s2 + $0x10] sm:$0xff]
    %v354 = vld [vmem:[%s2 + $0x18] sm:$0xff]
    %v355 = vld [vmem:[%s2 + $0x20] sm:$0xff]
    %v356 = vld [vmem:[%s2 + $0x28] sm:$0xff]
    %v357 = vld [vmem:[%s2 + $0x30] sm:$0xff]
    %v358 = vld [vmem:[%s2 + $0x38] sm:$0xff]
    %v359 = vld [vmem:[%s4] sm:$0x1]
    %v361 = vperm.slane %v359, 0
    %vm363 = vcmask 523264
    %v365 = vsel %vm363, %v347, 0
    %v368 = vsel %vm363, %v348, 0
    %v371 = vsel %vm363, %v349, 0
    %v374 = vsel %vm363, %v350, 0
    %376 = vmatpush.msra.mxu0 0.0
    %377 = vmatpush.msra.mxu0 0.0
    %378 = vmatpush.msra.mxu0 0.0
    %379 = vmatpush.msra.mxu0 0.0
    %380 = vmatpush.msra.mxu0 0.0
    %381 = vmatpush.msra.mxu0 0.0
    %382 = vmatpush.msra.mxu0 0.0
    %383 = vmatpush.msra.mxu0 0.0
    %384 = vmatpush.msra.mxu0 %v358
    %385 = vmatpush.msra.mxu0 %v357
    %386 = vmatpush.msra.mxu0 %v356
    %387 = vmatpush.msra.mxu0 %v355
    %388 = vmatpush.msra.mxu0 %v354
    %389 = vmatpush.msra.mxu0 %v353
    %390 = vmatpush.msra.mxu0 %v352
    %391 = vmatpush.msra.mxu0 %v351
    %392 = vmatmul.f32.gmra.mxu0 %v365
    %v393 = vpop.f32.mrf.mxu0
    %v394 = vadd.f32 %v361, %v393
    %395 = vmatmul.f32.gmra.mxu0 %v368
    %v396 = vpop.f32.mrf.mxu0
    %v397 = vadd.f32 %v361, %v396
    %398 = vmatmul.f32.gmra.mxu0 %v371
    %v399 = vpop.f32.mrf.mxu0
    %v400 = vadd.f32 %v361, %v399
    %401 = vmatmul.f32.gmra.mxu0 %v374
    %v402 = vpop.f32.mrf.mxu0
    %v403 = vadd.f32 %v361, %v402
    %404 = vdwg.mxu0
    %v405 = vld [vmem:[%s3] sm:$0xff]
    %v406 = vld [vmem:[%s3 + $0x8] sm:$0xff]
    %v407 = vld [vmem:[%s3 + $0x10] sm:$0xff]
    %v408 = vld [vmem:[%s3 + $0x18] sm:$0xff]
    %v410 = vsel %vm346, 0.0, 0
    %412 = vmatpush.msra.mxu0 0.0
    %413 = vmatpush.msra.mxu0 0.0
    %414 = vmatpush.msra.mxu0 0.0
    %415 = vmatpush.msra.mxu0 0.0
    %416 = vmatpush.msra.mxu0 0.0
    %417 = vmatpush.msra.mxu0 0.0
    %418 = vmatpush.msra.mxu0 0.0
    %419 = vmatpush.msra.mxu0 0.0
    %420 = vmatpush.msra.mxu0 0.0
    %421 = vmatpush.msra.mxu0 0.0
    %422 = vmatpush.msra.mxu0 0.0
    %423 = vmatpush.msra.mxu0 0.0
    %424 = vmatpush.msra.mxu0 %v408
    %425 = vmatpush.msra.mxu0 %v407
    %426 = vmatpush.msra.mxu0 %v406
    %427 = vmatpush.msra.mxu0 %v405
    %428 = vmatmul.f32.gmra.mxu0 %v410
    %v429 = vpop.f32.mrf.mxu0
    %v430 = vadd.f32 0.0, %v429
    %431 = vdwg.mxu0
    %v432 = vadd.f32 %v394, %v430
    %v433 = vxor.u32 %v432, 2147483648
    %v434 = vmul.f32 %v433, 1.442695
    %v435 = vpow.pop %v434
    %v436 = vadd.f32 %v435, 1.0
    %v437 = vrcp.pop %v436
    %v438 = vmul.f32 %v436, %v437
    %v439 = vsub.f32 1.0, %v438
    %v440 = vmul.f32 %v437, %v439
    %v441 = vadd.f32 %v437, %v440
    %vm442 = vweird.f32 %v436
    %vm443 = vweird.f32 %v437
    %vm444 = vmor %vm442, %vm443
    %v445 = vsel %vm444, %v437, %v441
    %v446 = vand.u32 2147483647, %v436
    %vm447 = vcmp.eq.f32.partialorder %v446, 8.507059e+37
    %v448 = vand.u32 %v436, 2147483648
    %v449 = vor.u32 1.1754944e-38, %v448
    %v450 = vsel %vm447, %v449, %v445
    %v451 = vmul.f32 1.0, %v450
    %v452 = vtanh.pop %v432
    %v453 = vmul.f32 %v451, 0.0
    %455 = vrot.lane.b32.xlu0 %v452, 64
    %v456 = vpop.permute.xlu0 %455
    %v458 = vmul.f32 %v451, %v456
    %460 = vrot.lane.b32.xlu0 %v458, 32
    %v461 = vpop.permute.xlu0 %460
    %v463 = vadd.f32 %v453, %v461
    %v464 = vtanh.pop %v463
    %466 = vrot.lane.b32.xlu0 %v464, 64
    %v467 = vpop.permute.xlu0 %466
    %v469 = vmul.f32 %v451, %v467
    %471 = vrot.lane.b32.xlu0 %v469, 32
    %v472 = vpop.permute.xlu0 %471
    %v473 = vsel %vm346, %v472, 0
    %475 = vmatpush.msra.mxu0 0.0
    %476 = vmatpush.msra.mxu0 0.0
    %477 = vmatpush.msra.mxu0 0.0
    %478 = vmatpush.msra.mxu0 0.0
    %479 = vmatpush.msra.mxu0 0.0
    %480 = vmatpush.msra.mxu0 0.0
    %481 = vmatpush.msra.mxu0 0.0
    %482 = vmatpush.msra.mxu0 0.0
    %483 = vmatpush.msra.mxu0 0.0
    %484 = vmatpush.msra.mxu0 0.0
    %485 = vmatpush.msra.mxu0 0.0
    %486 = vmatpush.msra.mxu0 0.0
    %487 = vmatpush.msra.mxu0 %v408
    %488 = vmatpush.msra.mxu0 %v407
    %489 = vmatpush.msra.mxu0 %v406
    %490 = vmatpush.msra.mxu0 %v405
    %491 = vmatmul.f32.gmra.mxu0 %v473
    %v492 = vpop.f32.mrf.mxu0
    %v493 = vadd.f32 0.0, %v492
    %494 = vdwg.mxu0
    %v496 = vrot.slane %v493, 4
    %v498 = vadd.f32 %v394, %v496
    %v499 = vxor.u32 %v498, 2147483648
    %v500 = vmul.f32 %v499, 1.442695
    %v501 = vpow.pop %v500
    %v502 = vadd.f32 %v501, 1.0
    %v503 = vrcp.pop %v502
    %v504 = vmul.f32 %v502, %v503
    %v505 = vsub.f32 1.0, %v504
    %v506 = vmul.f32 %v503, %v505
    %v507 = vadd.f32 %v503, %v506
    %vm508 = vweird.f32 %v502
    %vm509 = vweird.f32 %v503
    %vm510 = vmor %vm508, %vm509
    %v511 = vsel %vm510, %v503, %v507
    %v512 = vand.u32 2147483647, %v502
    %vm513 = vcmp.eq.f32.partialorder %v512, 8.507059e+37
    %v514 = vand.u32 %v502, 2147483648
    %v515 = vor.u32 1.1754944e-38, %v514
    %v516 = vsel %vm513, %v515, %v511
    %v517 = vmul.f32 1.0, %v516
    %v518 = vtanh.pop %v498
    %v520 = vrot.slane %v463, 4
    %v522 = vmul.f32 %v517, %v520
    %524 = vrot.lane.b32.xlu0 %v518, 64
    %v525 = vpop.permute.xlu0 %524
    %v527 = vmul.f32 %v517, %v525
    %529 = vrot.lane.b32.xlu0 %v527, 32
    %v530 = vpop.permute.xlu0 %529
    %v532 = vadd.f32 %v522, %v530
    %v533 = vtanh.pop %v532
    %535 = vrot.lane.b32.xlu0 %v533, 64
    %v536 = vpop.permute.xlu0 %535
    %v538 = vmul.f32 %v517, %v536
    %v540 = vrot.slane %v538, 4
    %541 = vrot.lane.b32.xlu0 %v540, 32
    %v542 = vpop.permute.xlu0 %541
    %v543 = vsel %vm346, %v542, 0
    %545 = vmatpush.msra.mxu0 0.0
    %546 = vmatpush.msra.mxu0 0.0
    %547 = vmatpush.msra.mxu0 0.0
    %548 = vmatpush.msra.mxu0 0.0
    %549 = vmatpush.msra.mxu0 0.0
    %550 = vmatpush.msra.mxu0 0.0
    %551 = vmatpush.msra.mxu0 0.0
    %552 = vmatpush.msra.mxu0 0.0
    %553 = vmatpush.msra.mxu0 0.0
    %554 = vmatpush.msra.mxu0 0.0
    %555 = vmatpush.msra.mxu0 0.0
    %556 = vmatpush.msra.mxu0 0.0
    %557 = vmatpush.msra.mxu0 %v408
    %558 = vmatpush.msra.mxu0 %v407
    %559 = vmatpush.msra.mxu0 %v406
    %560 = vmatpush.msra.mxu0 %v405
    %561 = vmatmul.f32.gmra.mxu0 %v543
    %v562 = vpop.f32.mrf.mxu0
    %v563 = vadd.f32 0.0, %v562
    %564 = vdwg.mxu0
    %v565 = vadd.f32 %v397, %v563
    %v566 = vxor.u32 %v565, 2147483648
    %v567 = vmul.f32 %v566, 1.442695
    %v568 = vpow.pop %v567
    %v569 = vadd.f32 %v568, 1.0
    %v570 = vrcp.pop %v569
    %v571 = vmul.f32 %v569, %v570
    %v572 = vsub.f32 1.0, %v571
    %v573 = vmul.f32 %v570, %v572
    %v574 = vadd.f32 %v570, %v573
    %vm575 = vweird.f32 %v569
    %vm576 = vweird.f32 %v570
    %vm577 = vmor %vm575, %vm576
    %v578 = vsel %vm577, %v570, %v574
    %v579 = vand.u32 2147483647, %v569
    %vm580 = vcmp.eq.f32.partialorder %v579, 8.507059e+37
    %v581 = vand.u32 %v569, 2147483648
    %v582 = vor.u32 1.1754944e-38, %v581
    %v583 = vsel %vm580, %v582, %v578
    %v584 = vmul.f32 1.0, %v583
    %v585 = vtanh.pop %v565
    %v587 = vrot.slane %v532, 4
    %v589 = vmul.f32 %v584, %v587
    %591 = vrot.lane.b32.xlu0 %v585, 64
    %v592 = vpop.permute.xlu0 %591
    %v594 = vmul.f32 %v584, %v592
    %596 = vrot.lane.b32.xlu0 %v594, 32
    %v597 = vpop.permute.xlu0 %596
    %v599 = vadd.f32 %v589, %v597
    %v600 = vtanh.pop %v599
    %602 = vrot.lane.b32.xlu0 %v600, 64
    %v603 = vpop.permute.xlu0 %602
    %v605 = vmul.f32 %v584, %v603
    %607 = vrot.lane.b32.xlu0 %v605, 32
    %v608 = vpop.permute.xlu0 %607
    %v609 = vsel %vm346, %v608, 0
    %611 = vmatpush.msra.mxu0 0.0
    %612 = vmatpush.msra.mxu0 0.0
    %613 = vmatpush.msra.mxu0 0.0
    %614 = vmatpush.msra.mxu0 0.0
    %615 = vmatpush.msra.mxu0 0.0
    %616 = vmatpush.msra.mxu0 0.0
    %617 = vmatpush.msra.mxu0 0.0
    %618 = vmatpush.msra.mxu0 0.0
    %619 = vmatpush.msra.mxu0 0.0
    %620 = vmatpush.msra.mxu0 0.0
    %621 = vmatpush.msra.mxu0 0.0
    %622 = vmatpush.msra.mxu0 0.0
    %623 = vmatpush.msra.mxu0 %v408
    %624 = vmatpush.msra.mxu0 %v407
    %625 = vmatpush.msra.mxu0 %v406
    %626 = vmatpush.msra.mxu0 %v405
    %627 = vmatmul.f32.gmra.mxu0 %v609
    %v628 = vpop.f32.mrf.mxu0
    %v629 = vadd.f32 0.0, %v628
    %630 = vdwg.mxu0
    %v632 = vrot.slane %v629, 4
    %v634 = vadd.f32 %v397, %v632
    %v635 = vxor.u32 %v634, 2147483648
    %v636 = vmul.f32 %v635, 1.442695
    %v637 = vpow.pop %v636
    %v638 = vadd.f32 %v637, 1.0
    %v639 = vrcp.pop %v638
    %v640 = vmul.f32 %v638, %v639
    %v641 = vsub.f32 1.0, %v640
    %v642 = vmul.f32 %v639, %v641
    %v643 = vadd.f32 %v639, %v642
    %vm644 = vweird.f32 %v638
    %vm645 = vweird.f32 %v639
    %vm646 = vmor %vm644, %vm645
    %v647 = vsel %vm646, %v639, %v643
    %v648 = vand.u32 2147483647, %v638
    %vm649 = vcmp.eq.f32.partialorder %v648, 8.507059e+37
    %v650 = vand.u32 %v638, 2147483648
    %v651 = vor.u32 1.1754944e-38, %v650
    %v652 = vsel %vm649, %v651, %v647
    %v653 = vmul.f32 1.0, %v652
    %v654 = vtanh.pop %v634
    %v656 = vrot.slane %v599, 4
    %v658 = vmul.f32 %v653, %v656
    %660 = vrot.lane.b32.xlu0 %v654, 64
    %v661 = vpop.permute.xlu0 %660
    %v663 = vmul.f32 %v653, %v661
    %665 = vrot.lane.b32.xlu0 %v663, 32
    %v666 = vpop.permute.xlu0 %665
    %v668 = vadd.f32 %v658, %v666
    %v669 = vtanh.pop %v668
    %671 = vrot.lane.b32.xlu0 %v669, 64
    %v672 = vpop.permute.xlu0 %671
    %v674 = vmul.f32 %v653, %v672
    %v676 = vrot.slane %v674, 4
    %677 = vrot.lane.b32.xlu0 %v676, 32
    %v678 = vpop.permute.xlu0 %677
    %v679 = vsel %vm346, %v678, 0
    %681 = vmatpush.msra.mxu0 0.0
    %682 = vmatpush.msra.mxu0 0.0
    %683 = vmatpush.msra.mxu0 0.0
    %684 = vmatpush.msra.mxu0 0.0
    %685 = vmatpush.msra.mxu0 0.0
    %686 = vmatpush.msra.mxu0 0.0
    %687 = vmatpush.msra.mxu0 0.0
    %688 = vmatpush.msra.mxu0 0.0
    %689 = vmatpush.msra.mxu0 0.0
    %690 = vmatpush.msra.mxu0 0.0
    %691 = vmatpush.msra.mxu0 0.0
    %692 = vmatpush.msra.mxu0 0.0
    %693 = vmatpush.msra.mxu0 %v408
    %694 = vmatpush.msra.mxu0 %v407
    %695 = vmatpush.msra.mxu0 %v406
    %696 = vmatpush.msra.mxu0 %v405
    %697 = vmatmul.f32.gmra.mxu0 %v679
    %v698 = vpop.f32.mrf.mxu0
    %v699 = vadd.f32 0.0, %v698
    %700 = vdwg.mxu0
    %v701 = vadd.f32 %v400, %v699
    %v702 = vxor.u32 %v701, 2147483648
    %v703 = vmul.f32 %v702, 1.442695
    %v704 = vpow.pop %v703
    %v705 = vadd.f32 %v704, 1.0
    %v706 = vrcp.pop %v705
    %v707 = vmul.f32 %v705, %v706
    %v708 = vsub.f32 1.0, %v707
    %v709 = vmul.f32 %v706, %v708
    %v710 = vadd.f32 %v706, %v709
    %vm711 = vweird.f32 %v705
    %vm712 = vweird.f32 %v706
    %vm713 = vmor %vm711, %vm712
    %v714 = vsel %vm713, %v706, %v710
    %v715 = vand.u32 2147483647, %v705
    %vm716 = vcmp.eq.f32.partialorder %v715, 8.507059e+37
    %v717 = vand.u32 %v705, 2147483648
    %v718 = vor.u32 1.1754944e-38, %v717
    %v719 = vsel %vm716, %v718, %v714
    %v720 = vmul.f32 1.0, %v719
    %v721 = vtanh.pop %v701
    %v723 = vrot.slane %v668, 4
    %v725 = vmul.f32 %v720, %v723
    %727 = vrot.lane.b32.xlu0 %v721, 64
    %v728 = vpop.permute.xlu0 %727
    %v730 = vmul.f32 %v720, %v728
    %732 = vrot.lane.b32.xlu0 %v730, 32
    %v733 = vpop.permute.xlu0 %732
    %v735 = vadd.f32 %v725, %v733
    %v736 = vtanh.pop %v735
    %738 = vrot.lane.b32.xlu0 %v736, 64
    %v739 = vpop.permute.xlu0 %738
    %v741 = vmul.f32 %v720, %v739
    %743 = vrot.lane.b32.xlu0 %v741, 32
    %v744 = vpop.permute.xlu0 %743
    %v745 = vsel %vm346, %v744, 0
    %747 = vmatpush.msra.mxu0 0.0
    %748 = vmatpush.msra.mxu0 0.0
    %749 = vmatpush.msra.mxu0 0.0
    %750 = vmatpush.msra.mxu0 0.0
    %751 = vmatpush.msra.mxu0 0.0
    %752 = vmatpush.msra.mxu0 0.0
    %753 = vmatpush.msra.mxu0 0.0
    %754 = vmatpush.msra.mxu0 0.0
    %755 = vmatpush.msra.mxu0 0.0
    %756 = vmatpush.msra.mxu0 0.0
    %757 = vmatpush.msra.mxu0 0.0
    %758 = vmatpush.msra.mxu0 0.0
    %759 = vmatpush.msra.mxu0 %v408
    %760 = vmatpush.msra.mxu0 %v407
    %761 = vmatpush.msra.mxu0 %v406
    %762 = vmatpush.msra.mxu0 %v405
    %763 = vmatmul.f32.gmra.mxu0 %v745
    %v764 = vpop.f32.mrf.mxu0
    %v765 = vadd.f32 0.0, %v764
    %766 = vdwg.mxu0
    %v768 = vrot.slane %v765, 4
    %v770 = vadd.f32 %v400, %v768
    %v771 = vxor.u32 %v770, 2147483648
    %v772 = vmul.f32 %v771, 1.442695
    %v773 = vpow.pop %v772
    %v774 = vadd.f32 %v773, 1.0
    %v775 = vrcp.pop %v774
    %v776 = vmul.f32 %v774, %v775
    %v777 = vsub.f32 1.0, %v776
    %v778 = vmul.f32 %v775, %v777
    %v779 = vadd.f32 %v775, %v778
    %vm780 = vweird.f32 %v774
    %vm781 = vweird.f32 %v775
    %vm782 = vmor %vm780, %vm781
    %v783 = vsel %vm782, %v775, %v779
    %v784 = vand.u32 2147483647, %v774
    %vm785 = vcmp.eq.f32.partialorder %v784, 8.507059e+37
    %v786 = vand.u32 %v774, 2147483648
    %v787 = vor.u32 1.1754944e-38, %v786
    %v788 = vsel %vm785, %v787, %v783
    %v789 = vmul.f32 1.0, %v788
    %v790 = vtanh.pop %v770
    %v792 = vrot.slane %v735, 4
    %v794 = vmul.f32 %v789, %v792
    %796 = vrot.lane.b32.xlu0 %v790, 64
    %v797 = vpop.permute.xlu0 %796
    %v799 = vmul.f32 %v789, %v797
    %801 = vrot.lane.b32.xlu0 %v799, 32
    %v802 = vpop.permute.xlu0 %801
    %v804 = vadd.f32 %v794, %v802
    %v805 = vtanh.pop %v804
    %807 = vrot.lane.b32.xlu0 %v805, 64
    %v808 = vpop.permute.xlu0 %807
    %v810 = vmul.f32 %v789, %v808
    %v812 = vrot.slane %v810, 4
    %813 = vrot.lane.b32.xlu0 %v812, 32
    %v814 = vpop.permute.xlu0 %813
    %v815 = vsel %vm346, %v814, 0
    %817 = vmatpush.msra.mxu0 0.0
    %818 = vmatpush.msra.mxu0 0.0
    %819 = vmatpush.msra.mxu0 0.0
    %820 = vmatpush.msra.mxu0 0.0
    %821 = vmatpush.msra.mxu0 0.0
    %822 = vmatpush.msra.mxu0 0.0
    %823 = vmatpush.msra.mxu0 0.0
    %824 = vmatpush.msra.mxu0 0.0
    %825 = vmatpush.msra.mxu0 0.0
    %826 = vmatpush.msra.mxu0 0.0
    %827 = vmatpush.msra.mxu0 0.0
    %828 = vmatpush.msra.mxu0 0.0
    %829 = vmatpush.msra.mxu0 %v408
    %830 = vmatpush.msra.mxu0 %v407
    %831 = vmatpush.msra.mxu0 %v406
    %832 = vmatpush.msra.mxu0 %v405
    %833 = vmatmul.f32.gmra.mxu0 %v815
    %v834 = vpop.f32.mrf.mxu0
    %v835 = vadd.f32 0.0, %v834
    %836 = vdwg.mxu0
    %v837 = vadd.f32 %v403, %v835
    %v838 = vxor.u32 %v837, 2147483648
    %v839 = vmul.f32 %v838, 1.442695
    %v840 = vpow.pop %v839
    %v841 = vadd.f32 %v840, 1.0
    %v842 = vrcp.pop %v841
    %v843 = vmul.f32 %v841, %v842
    %v844 = vsub.f32 1.0, %v843
    %v845 = vmul.f32 %v842, %v844
    %v846 = vadd.f32 %v842, %v845
    %vm847 = vweird.f32 %v841
    %vm848 = vweird.f32 %v842
    %vm849 = vmor %vm847, %vm848
    %v850 = vsel %vm849, %v842, %v846
    %v851 = vand.u32 2147483647, %v841
    %vm852 = vcmp.eq.f32.partialorder %v851, 8.507059e+37
    %v853 = vand.u32 %v841, 2147483648
    %v854 = vor.u32 1.1754944e-38, %v853
    %v855 = vsel %vm852, %v854, %v850
    %v856 = vmul.f32 1.0, %v855
    %v857 = vtanh.pop %v837
    %v859 = vrot.slane %v804, 4
    %v861 = vmul.f32 %v856, %v859
    %863 = vrot.lane.b32.xlu0 %v857, 64
    %v864 = vpop.permute.xlu0 %863
    %v866 = vmul.f32 %v856, %v864
    %868 = vrot.lane.b32.xlu0 %v866, 32
    %v869 = vpop.permute.xlu0 %868
    %v871 = vadd.f32 %v861, %v869
    %v872 = vtanh.pop %v871
    %874 = vrot.lane.b32.xlu0 %v872, 64
    %v875 = vpop.permute.xlu0 %874
    %v877 = vmul.f32 %v856, %v875
    %879 = vrot.lane.b32.xlu0 %v877, 32
    %v880 = vpop.permute.xlu0 %879
    %v881 = vsel %vm346, %v880, 0
    %883 = vmatpush.msra.mxu0 0.0
    %884 = vmatpush.msra.mxu0 0.0
    %885 = vmatpush.msra.mxu0 0.0
    %886 = vmatpush.msra.mxu0 0.0
    %887 = vmatpush.msra.mxu0 0.0
    %888 = vmatpush.msra.mxu0 0.0
    %889 = vmatpush.msra.mxu0 0.0
    %890 = vmatpush.msra.mxu0 0.0
    %891 = vmatpush.msra.mxu0 0.0
    %892 = vmatpush.msra.mxu0 0.0
    %893 = vmatpush.msra.mxu0 0.0
    %894 = vmatpush.msra.mxu0 0.0
    %895 = vmatpush.msra.mxu0 %v408
    %896 = vmatpush.msra.mxu0 %v407
    %897 = vmatpush.msra.mxu0 %v406
    %898 = vmatpush.msra.mxu0 %v405
    %899 = vmatmul.f32.gmra.mxu0 %v881
    %v900 = vpop.f32.mrf.mxu0
    %v901 = vadd.f32 0.0, %v900
    %902 = vdwg.mxu0
    %v904 = vrot.slane %v901, 4
    %v906 = vadd.f32 %v403, %v904
    %v907 = vxor.u32 %v906, 2147483648
    %v908 = vmul.f32 %v907, 1.442695
    %v909 = vpow.pop %v908
    %v910 = vadd.f32 %v909, 1.0
    %v911 = vrcp.pop %v910
    %v912 = vmul.f32 %v910, %v911
    %v913 = vsub.f32 1.0, %v912
    %v914 = vmul.f32 %v911, %v913
    %v915 = vadd.f32 %v911, %v914
    %vm916 = vweird.f32 %v910
    %vm917 = vweird.f32 %v911
    %vm918 = vmor %vm916, %vm917
    %v919 = vsel %vm918, %v911, %v915
    %v920 = vand.u32 2147483647, %v910
    %vm921 = vcmp.eq.f32.partialorder %v920, 8.507059e+37
    %v922 = vand.u32 %v910, 2147483648
    %v923 = vor.u32 1.1754944e-38, %v922
    %v924 = vsel %vm921, %v923, %v919
    %v925 = vmul.f32 1.0, %v924
    %v926 = vtanh.pop %v906
    %v928 = vrot.slane %v871, 4
    %v930 = vmul.f32 %v925, %v928
    %932 = vrot.lane.b32.xlu0 %v926, 64
    %v933 = vpop.permute.xlu0 %932
    %v935 = vmul.f32 %v925, %v933
    %937 = vrot.lane.b32.xlu0 %v935, 32
    %v938 = vpop.permute.xlu0 %937
    %v940 = vadd.f32 %v930, %v938
    %v941 = vtanh.pop %v940
    %943 = vrot.lane.b32.xlu0 %v941, 64
    %v944 = vpop.permute.xlu0 %943
    %v946 = vmul.f32 %v925, %v944
    %v949 = vrot.slane %v946, 4
    %950 = vrot.lane.b32.xlu0 %v949, 32
    %v951 = vpop.permute.xlu0 %950
    %953 = vrot.lane.b32.xlu0 %v540, 64
    %v954 = vpop.permute.xlu0 %953
    %956 = vrot.lane.b32.xlu0 %v877, 64
    %v957 = vpop.permute.xlu0 %956
    %959 = vrot.lane.b32.xlu0 %v605, 96
    %v960 = vpop.permute.xlu0 %959
    %962 = vrot.lane.b32.xlu0 %v812, 96
    %v963 = vpop.permute.xlu0 %962
    %968 = vrot.lane.b32.xlu0 %v812, 64
    %v969 = vpop.permute.xlu0 %968
    %971 = vrot.lane.b32.xlu0 %v605, 64
    %v972 = vpop.permute.xlu0 %971
    %974 = vrot.lane.b32.xlu0 %v877, 96
    %v975 = vpop.permute.xlu0 %974
    %977 = vrot.lane.b32.xlu0 %v540, 96
    %v978 = vpop.permute.xlu0 %977
    %vm981 = vcmask 130048
    %v982 = vsel %vm981, %v472, %v951
    %v983 = vsel %vm346, %v982, %v954
    %vm984 = vcmask 392192
    %v985 = vsel %vm984, %v983, %v957
    %v986 = vsel %vm363, %v985, %v960
    %vm987 = vcmask 654336
    %v988 = vsel %vm987, %v986, %v963
    %vm989 = vcmask 785408
    %v990 = vsel %vm989, %v988, %v676
    %vm991 = vcmask 916480
    %v992 = vsel %vm991, %v990, %v741
    %v993 = vsel %vm981, %v744, %v678
    %v994 = vsel %vm346, %v993, %v969
    %v995 = vsel %vm984, %v994, %v972
    %v996 = vsel %vm363, %v995, %v975
    %v997 = vsel %vm987, %v996, %v978
    %v998 = vsel %vm989, %v997, %v949
    %v999 = vsel %vm991, %v998, %v469
    %v1002 = vrot.slane %v999, 4
    %v1003 = vsel %vm171, %v992, %v1002
    %1005 = vst [vmem:[#allocation4] sm:$0xff] %v1003
    // Predicated region
    $region18: #{tpu_custom_call.1} parent=1 // pred_check
      _
    $region19: #{tpu_custom_call.1} parent=1 // pred_check_branch
      %1007 = sbr.rel (0) target = $region21
    $region20: #{tpu_custom_call.1} parent=1 // pred_region
      %1009 = vsyncadd [#allocation5], 0
      %s1011 = sshll.u32 [#allocation4], 4
      %s1012 = int_to_ptr.vmem [resolvable:$true] %s1011
      %s1013 = sshll.u32 %s5, 4
      %s1014 = int_to_ptr.hbm [resolvable:$true] %s1013
      %1016 = dma.vmem_to_hbm [thread:$0]  %s1012, 128, %s1014, [#allocation5]
    $region21: #{tpu_custom_call.1} parent=1 // pred_fallthru
      _
    // Predicated region
    $region22: #{tpu_custom_call.1} parent=1 // pred_check
      _
    $region23: #{tpu_custom_call.1} parent=1 // pred_check_branch
      %1018 = sbr.rel (0) target = $region25
    $region24: #{tpu_custom_call.1} parent=1 // pred_region
      %1020 = dma.done [#allocation5], 128
    $region25: #{tpu_custom_call.1} parent=1 // pred_fallthru
      _
    %1021 = vsyncpa [#allocation5], 1

</llo_original>
